<compile_context>
chip_gen: v7x
topology: tpu7x:2x2x1
jax: 0.10.0
libtpu: 0.0.40
codegen_flags: <defaults>
</compile_context>

<pallas_src>
import math

import jax
import jax.numpy as jnp
from jax.experimental import pallas as pl
from jax.experimental.pallas import tpu as pltpu

_LN10_OVER_10 = math.log(10.0) / 10.0


# ------------------------------- kernel body -------------------------------
def _add_noise_kernel(perm_ref, x_ref, n_ref, snr_ref, o_ref):
    """One (RT, F) row tile of one batch sample.

    perm_ref is the scalar-prefetch sample permutation; it is consumed by the
    noise index_map and unused in the body.
    """
    del perm_ref
    x = x_ref[...].astype(jnp.float32)            # (RT, F)
    n = n_ref[...].astype(jnp.float32)            # (RT, F)
    snr_db = snr_ref[...]                         # (RT, 1) f32

    e_sig = jnp.sum(x * x, axis=-1, keepdims=True)     # (RT, 1)  XLU reduce
    e_noise = jnp.sum(n * n, axis=-1, keepdims=True)   # (RT, 1)
    snr_lin = jnp.exp(snr_db * _LN10_OVER_10)          # 10**(snr_db/10) (EUP)
    # NOTE: rows whose noise is all zero give inf/NaN scale, matching torchaudio.
    scale = jnp.sqrt(e_sig / (e_noise * snr_lin))      # (RT, 1)

    if o_ref.dtype == jnp.bfloat16:
        # bf16 VPU path (v6e/v7x): keep the full-tile multiply-add in bf16.
        o_ref[...] = (x_ref[...].astype(jnp.bfloat16)
                      + scale.astype(jnp.bfloat16) * n_ref[...].astype(jnp.bfloat16))
    else:
        o_ref[...] = (x + scale * n).astype(o_ref.dtype)


# ------------------------------ tiling helpers ------------------------------
def _vmem_limit_bytes():
    """Generation-aware VMEM limit: ~48 MiB on v7x (64 MiB phys), ~96 MiB on
    v5e/v6e (128 MiB phys)."""
    try:
        cap = int(pltpu.get_tpu_info().vmem_capacity_bytes)
    except Exception:
        cap = 64 << 20                         # be v7x-conservative if unknown
    return max(32 << 20, min(cap * 3 // 4, cap - (16 << 20)))


def _pick_row_tile(rows, feat_padded, itemsizes, budget_bytes, need_split):
    """Largest row tile that (a) divides `rows`, (b) respects the sublane tile,
    and (c) keeps the double-buffered x/noise/out blocks plus the lane-padded
    (RT,1) snr blocks under `budget_bytes`."""
    min_sub = max([8] + [32 // it for it in itemsizes])
    per_row = 2 * (feat_padded * sum(itemsizes) + 128 * 4)   # 2x = double buffer
    cap = max(min_sub, budget_bytes // per_row)
    if need_split:                              # keep grid size >= 2 (megacore)
        cap = min(cap, max(min_sub, rows // 2))
    if rows <= cap and not need_split:
        return rows                             # full extent is always legal
    for rt in range(min(cap, rows), min_sub - 1, -1):
        if rows % rt == 0 and rt % min_sub == 0:
            return rt
    return rows


# ------------------------------ pallas wrapper ------------------------------
def add_noise_pallas(x, noise_buf, snr_db, samp_perm=None, *,
                     row_tile=None, donate_x=False):
    """out[b] = x[b] + scale * noise_buf[samp_perm[b]]  (torchaudio add_noise SNR).

    x:         (B, H, T, F) float
    noise_buf: (N, H, T, F) any float dtype (read in place, cast in-kernel)
    snr_db:    (B, H, T)
    samp_perm: (B,) int32 indices into the noise buffer's sample axis.
    """
    B, H, T, F = x.shape
    N = noise_buf.shape[0]
    assert noise_buf.shape[1:] == (H, T, F), (noise_buf.shape, x.shape)
    assert snr_db.shape == (B, H, T), (snr_db.shape, x.shape)
    assert jnp.issubdtype(x.dtype, jnp.floating), "add_noise requires a float dtype"
    assert N >= B, (N, B)

    if samp_perm is None:
        samp_perm = jnp.arange(B, dtype=jnp.int32)
    samp_perm = samp_perm.astype(jnp.int32)

    rows = H * T
    # Lane-dense stores: pad F to a multiple of 128 (zero padding does not
    # change the row energies), slice back afterwards.
    Fp = ((F + 127) // 128) * 128
    x2 = x.reshape(B, rows, F)
    nb = noise_buf.reshape(N, rows, F)          # metadata-only reshape
    if Fp != F:
        x2 = jnp.pad(x2, ((0, 0), (0, 0), (0, Fp - F)))
        nb = jnp.pad(nb, ((0, 0), (0, 0), (0, Fp - F)))
    s2 = snr_db.astype(jnp.float32).reshape(B, rows, 1)

    itemsizes = (jnp.dtype(x.dtype).itemsize,
                 jnp.dtype(noise_buf.dtype).itemsize,
                 jnp.dtype(x.dtype).itemsize)
    vmem_limit = _vmem_limit_bytes()
    rt = (_pick_row_tile(rows, Fp, itemsizes, vmem_limit // 2, need_split=(B == 1))
          if row_tile is None else row_tile)
    assert rows % rt == 0, (rows, rt)

    x_map = lambda b, r, perm: (b, r, 0)
    n_map = lambda b, r, perm: (perm[b], r, 0)   # sample gather via index_map

    out = pl.pallas_call(
        _add_noise_kernel,
        out_shape=jax.ShapeDtypeStruct((B, rows, Fp), x.dtype),
        grid_spec=pltpu.PrefetchScalarGridSpec(
            num_scalar_prefetch=1,
            grid=(B, rows // rt),
            in_specs=[
                pl.BlockSpec((pl.Squeezed(), rt, Fp), x_map),    # x
                pl.BlockSpec((pl.Squeezed(), rt, Fp), n_map),    # raw noise buffer
                pl.BlockSpec((pl.Squeezed(), rt, 1), x_map),     # snr (dB)
            ],
            out_specs=pl.BlockSpec((pl.Squeezed(), rt, Fp), x_map),
        ),
        compiler_params=pltpu.CompilerParams(
            dimension_semantics=("parallel", "parallel"),
            vmem_limit_bytes=vmem_limit,
        ),
        # operand 0 is the scalar-prefetch perm, so x is operand 1.
        input_output_aliases=({1: 0} if (donate_x and Fp == F) else {}),
    )(samp_perm, x2, nb, s2)

    if Fp != F:
        out = out[..., :F]
    return out.reshape(B, H, T, F)


# --------------------------- ReadNoise module glue ---------------------------
def init_read_noise_buffers(key, size, alpha=0.1, mask=None):
    """ReadNoise.__init__: noise ~ N(0,1), snr = 10*log10(1/alpha)*ones, mask zeroing."""
    noise = jax.random.normal(key, tuple(size), dtype=jnp.float32)
    snr = jnp.full(tuple(size[:-1]), 10.0 * math.log10(1.0 / alpha), dtype=jnp.float32)
    if mask is not None:
        noise = jnp.where(jnp.broadcast_to(mask, noise.shape) == 0, 0.0, noise)
    return noise, snr


def _draw_perms(key, n_buf, n_samples, n_features):
    """torch.randperm(N)[:n_samples] and torch.randperm(n_features)."""
    k_s, k_f = jax.random.split(key)
    samp_perm = jax.random.permutation(k_s, n_buf)[:n_samples].astype(jnp.int32)
    feat_perm = jax.random.permutation(k_f, n_features)
    return samp_perm, feat_perm


def read_noise_forward(x, noise_buf, snr_buf, key, *, training=False, row_tile=None):
    """Pallas equivalent of ReadNoise.forward (noise only added in eval mode)."""
    if training:
        return x
    B, H, T, F = x.shape
    samp_perm, feat_perm = _draw_perms(key, noise_buf.shape[0], B, F)
    # The sample permutation is folded into the kernel's noise index_map
    # (scalar prefetch) -> no materialized noise[samp_perm] HBM pass.
    # TODO(synk): also fold the feature permutation into the kernel (in-kernel
    # lane gather / one-hot MXU matmul); kept as a single XLA gather here to
    # preserve exact f32 semantics.
    noise_fp = jnp.take(noise_buf, feat_perm, axis=3)
    snr_sel = snr_buf[:B]                        # (B, H, T)
    return add_noise_pallas(x, noise_fp, snr_sel, samp_perm, row_tile=row_tile)


if __name__ == "__main__":
    root = jax.random.PRNGKey(0)
    k_noise, k_x, k_fwd = jax.random.split(root, 3)

    # Attention-score shapes: (n_samples, n_heads, n_tokens, n_features).
    # F = 128 keeps the output lane-dense; noise buffer holds extra samples.
    B, H, T, F = 2, 4, 128, 128
    N_BUF = 4

    causal = jnp.tril(jnp.ones((T, T), dtype=jnp.float32))[None, None]     # (1,1,T,T)
    noise_buf, snr_buf = init_read_noise_buffers(
        k_noise, (N_BUF, H, T, F), alpha=0.1, mask=causal)

    x = jax.random.normal(k_x, (B, H, T, F), dtype=jnp.float32)

    out = read_noise_forward(x, noise_buf, snr_buf, k_fwd, training=False)
    out = jax.block_until_ready(out)

    # Plain-JAX reference using the exact torchaudio.functional.add_noise formula,
    # with the same permutations as the forward path.
    samp_perm, feat_perm = _draw_perms(k_fwd, N_BUF, B, F)
    noise_sel = jnp.take(jnp.take(noise_buf, samp_perm, axis=0), feat_perm, axis=3)
    snr_sel = snr_buf[:B]
    e_sig = jnp.sum(x * x, axis=-1, keepdims=True)
    e_noise = jnp.sum(noise_sel * noise_sel, axis=-1, keepdims=True)
    orig_snr_db = 10.0 * (jnp.log10(e_sig) - jnp.log10(e_noise))
    scale = 10.0 ** ((orig_snr_db - snr_sel[..., None]) / 20.0)
    ref = x + scale * noise_sel

    assert out.shape == x.shape and out.dtype == x.dtype
    assert bool(jnp.allclose(out, ref, rtol=2e-5, atol=2e-5)), \
        float(jnp.max(jnp.abs(out - ref)))

    # Explicit row tiling (grid > 1 along the row axis) must agree too.
    out_tiled = jax.block_until_ready(
        read_noise_forward(x, noise_buf, snr_buf, k_fwd, training=False, row_tile=64))
    assert bool(jnp.allclose(out_tiled, ref, rtol=2e-5, atol=2e-5))

    # Training mode is the identity, as in the PyTorch module.
    assert bool(jnp.array_equal(
        read_noise_forward(x, noise_buf, snr_buf, k_fwd, training=True), x))

    print("KERNEL_OK")
</pallas_src>

<mosaic_0001>
module attributes {stable_mosaic.version = 11 : i64} {
  func.func @_add_noise_kernel(%arg0: i32, %arg1: i32, %arg2: memref<2xi32, #tpu.memory_space<smem>>, %arg3: memref<1x512x128xf32, #tpu.memory_space<vmem>>, %arg4: memref<1x512x128xf32, #tpu.memory_space<vmem>>, %arg5: memref<1x512x1xf32, #tpu.memory_space<vmem>>, %arg6: memref<1x512x128xf32, #tpu.memory_space<vmem>>) attributes {dimension_semantics = [#tpu.dimension_semantics<parallel>, #tpu.dimension_semantics<parallel>], iteration_bounds = array<i64: 2, 1>, scalar_prefetch = 1 : i64, scratch_operands = 0 : i64, tpu.core_type = #tpu.core_type<tc>, window_params = [{transform_indices = @transform_0, window_bounds = array<i64: 1, 512, 128>}, {transform_indices = @transform_1, window_bounds = array<i64: 1, 512, 128>}, {transform_indices = @transform_2, window_bounds = array<i64: 1, 512, 1>}, {transform_indices = @transform_3, window_bounds = array<i64: 1, 512, 128>}]} {
    %c0 = arith.constant 0 : index
    %c0_0 = arith.constant 0 : index
    %c0_1 = arith.constant 0 : index
    %0 = vector.load %arg3[%c0, %c0_0, %c0_1] : memref<1x512x128xf32, #tpu.memory_space<vmem>>, vector<1x512x128xf32>
    %1 = vector.shape_cast %0 : vector<1x512x128xf32> to vector<512x128xf32>
    %c0_2 = arith.constant 0 : index
    %c0_3 = arith.constant 0 : index
    %c0_4 = arith.constant 0 : index
    %2 = vector.load %arg4[%c0_2, %c0_3, %c0_4] : memref<1x512x128xf32, #tpu.memory_space<vmem>>, vector<1x512x128xf32>
    %3 = vector.shape_cast %2 : vector<1x512x128xf32> to vector<512x128xf32>
    %c0_5 = arith.constant 0 : index
    %c0_6 = arith.constant 0 : index
    %c0_7 = arith.constant 0 : index
    %4 = vector.load %arg5[%c0_5, %c0_6, %c0_7] : memref<1x512x1xf32, #tpu.memory_space<vmem>>, vector<1x512x1xf32>
    %5 = vector.shape_cast %4 : vector<1x512x1xf32> to vector<512x1xf32>
    %6 = arith.mulf %1, %1 : vector<512x128xf32>
    %cst = arith.constant dense<0.000000e+00> : vector<512xf32>
    %7 = vector.multi_reduction <add>, %6, %cst [1] : vector<512x128xf32> to vector<512xf32>
    %8 = vector.shape_cast %7 : vector<512xf32> to vector<512x1xf32>
    %9 = arith.mulf %3, %3 : vector<512x128xf32>
    %cst_8 = arith.constant dense<0.000000e+00> : vector<512xf32>
    %10 = vector.multi_reduction <add>, %9, %cst_8 [1] : vector<512x128xf32> to vector<512xf32>
    %11 = vector.shape_cast %10 : vector<512xf32> to vector<512x1xf32>
    %cst_9 = arith.constant 0.23025851 : f32
    %12 = vector.broadcast %cst_9 : f32 to vector<512x1xf32>
    %13 = arith.mulf %5, %12 : vector<512x1xf32>
    %14 = math.exp %13 : vector<512x1xf32>
    %15 = arith.mulf %11, %14 : vector<512x1xf32>
    %16 = arith.divf %8, %15 : vector<512x1xf32>
    %17 = math.sqrt %16 : vector<512x1xf32>
    %18 = vector.broadcast %17 : vector<512x1xf32> to vector<512x128xf32>
    %19 = arith.mulf %18, %3 : vector<512x128xf32>
    %20 = arith.addf %1, %19 : vector<512x128xf32>
    %c0_10 = arith.constant 0 : index
    %c0_11 = arith.constant 0 : index
    %c0_12 = arith.constant 0 : index
    %21 = vector.load %arg6[%c0_10, %c0_11, %c0_12] : memref<1x512x128xf32, #tpu.memory_space<vmem>>, vector<1x512x128xf32>
    %22 = vector.shape_cast %21 : vector<1x512x128xf32> to vector<512x128xf32>
    %23 = vector.shape_cast %20 : vector<512x128xf32> to vector<1x512x128xf32>
    tpu.vector_store %arg6[%c0_10, %c0_11, %c0_12], %23 {strides = array<i32>} : memref<1x512x128xf32, #tpu.memory_space<vmem>>, vector<1x512x128xf32>,
    return
  }
  func.func @transform_0(%arg0: i32, %arg1: i32, %arg2: memref<2xi32, #tpu.memory_space<smem>>) -> (i32, i32, i32) {
    %c0_i32 = arith.constant 0 : i32
    %c0_i32_0 = arith.constant 0 : i32
    return %arg0, %arg1, %c0_i32 : i32, i32, i32
  }
  func.func @transform_1(%arg0: i32, %arg1: i32, %arg2: memref<2xi32, #tpu.memory_space<smem>>) -> (i32, i32, i32) {
    %0 = arith.index_cast %arg0 : i32 to index
    %1 = memref.load %arg2[%0] : memref<2xi32, #tpu.memory_space<smem>>
    %c0_i32 = arith.constant 0 : i32
    %c0_i32_0 = arith.constant 0 : i32
    return %1, %arg1, %c0_i32 : i32, i32, i32
  }
  func.func @transform_2(%arg0: i32, %arg1: i32, %arg2: memref<2xi32, #tpu.memory_space<smem>>) -> (i32, i32, i32) {
    %c0_i32 = arith.constant 0 : i32
    %c0_i32_0 = arith.constant 0 : i32
    return %arg0, %arg1, %c0_i32 : i32, i32, i32
  }
  func.func @transform_3(%arg0: i32, %arg1: i32, %arg2: memref<2xi32, #tpu.memory_space<smem>>) -> (i32, i32, i32) {
    %c0_i32 = arith.constant 0 : i32
    %c0_i32_0 = arith.constant 0 : i32
    return %arg0, %arg1, %c0_i32 : i32, i32, i32
  }
}

</mosaic_0001>

<llo_original>
// kernel: tpu_custom_call.1
$region0: #{tpu_custom_call.1}
  #allocation0 [shape = 'u32[]', space=smem, size = 0x4, offset = 0x4, fixed_abs, tag = 'smem constant byte address 0x4 - core index']
  #allocation1 [shape = 'u32[144,128]{1,0:T(1,128)}', space=vmem, size = 0x12000, scoped, tag = 'internal scratch']
  #allocation2 [shape = 's32[1]{0}', space=sflag, size = 0x4, scoped, tag = 'scoped memory for tpu_custom_call.1']
  #allocation3 [shape = 'u8[512]{0}', space=smem, size = 0x200, scoped, tag = 'prefetched SMEM operand 0']
  %s0 = inlined_call_operand.vmem [shape: s32[2], index: 0, kind: input, shape index: {}]
  %s1 = inlined_call_operand.vmem [shape: f32[2,512,128], index: 1, kind: input, shape index: {}]
  %s2 = inlined_call_operand.hbm [shape: f32[4,512,128], index: 2, kind: input, shape index: {}]
  %s3 = inlined_call_operand.vmem [shape: f32[2,512,1], index: 3, kind: input, shape index: {}]
  %s4 = inlined_call_operand.hbm [shape: f32[2,512,128], index: 4, kind: output, shape index: {}]
  %s5 = sld [smem:[#allocation0]]
  $region49: #{tpu_custom_call.1} parent=0
    _
  %s7 = ssub.s32 1, %s5
  %s8 = scalar_select 0, %s7, %s5
  %s9 = sshll.u32 %s0, 4
  %s10 = int_to_ptr.vmem [resolvable:$true] %s9
  %12 = dma.vmem_to_smem %s10, 16, [#allocation3], [#allocation2]
  %13 = dma.done [#allocation2], 16
  %14 = sfence
  $region1: #{tpu_custom_call.1} parent=0
    #allocation4 [shape = 'u8[524288]{0}', space=vmem, size = 0x80000, scoped, tag = 'input window, operand 2']
    #allocation5 [shape = 's32[2]{0}', space=sflag, size = 0x8, scoped, tag = 'scoped memory for tpu_custom_call.1']
    #allocation6 [shape = 's32[2]{0}', space=sflag, size = 0x8, scoped, tag = 'scoped memory for tpu_custom_call.1']
    #allocation7 [shape = 'u8[524288]{0}', space=vmem, size = 0x80000, scoped, tag = 'output window, operand 0']
    %15 = vsyncpa [#allocation5], 0
    %s16 = scalar_lea.sflag [#allocation5], 1
    %17 = vsyncpa %s16, 0
    %18 = vsyncpa [#allocation6], 0
    %s19 = scalar_lea.sflag [#allocation6], 1
    %20 = vsyncpa %s19, 0
    loop: start=0, step=1, limit=4
    $region2: #{tpu_custom_call.1} parent=1 // loop_pre_header
      _
    $region3: #{tpu_custom_call.1} parent=1 // loop_header
      %s22 = sphi 0, %s26
      %p23 = scmp.ge.s32.totalorder %s22, 4
      %s29 = sphi 0, %s41
      %s30 = sphi 0, %s37
      %s31 = sphi 0, %s29
      %s32 = sphi 0, %s30
      %s33 = sphi 0, %s31
      %s34 = sphi 0, %s32
      %s46 = sphi 0, %s48
      %s49 = sphi 0, %s46
      %s50 = sphi 0, %s49
      %s66 = sphi 0, %s50
      %s76 = sphi 0, %s78
      %s79 = sphi 0, %s76
      %s80 = sphi 0, %s79
      %s96 = sphi 0, %s80
      %s104 = sphi 0, %s106
      %s107 = sphi 0, %s104
      %s108 = sphi 0, %s107
      %s124 = sphi 0, %s108
      %s132 = sphi 0, %s134
      %s135 = sphi 0, %s132
      %s136 = sphi 0, %s135
      %s152 = sphi 0, %s136
    $region4: #{tpu_custom_call.1} parent=1 // loop_header_branch
      %25 = sbr.rel (%p23) target = $region8
    $region5: #{tpu_custom_call.1} parent=1 // loop_body
      %s27 = ssub.s32 %s22, 1
      %s28 = ssub.s32 %s22, 2
      %s35 = sadd.s32 1, %s30
      %p36 = scmp.ge.s32.totalorder %s35, 1
      %s37 = scalar_select %p36, 0, %s35
      %s38 = sadd.s32 1, %s29
      %s39 = scalar_select %p36, %s38, %s29
      %p40 = scmp.ge.s32.totalorder %s39, 2
      %s41 = scalar_select %p40, 0, %s39
      %s42 = ssub.s32 %s29, %s41
      %s43 = ssub.s32 %s30, %s37
      %s44 = sor.u32 %s42, %s43
      %p45 = scmp.eq.s32.totalorder %s44, 0
      %s47 = sadd.s32 %s46, 1
      %s48 = scalar_select %p45, %s46, %s47
      %p51 = pneg %p45
      %p52 = scmp.eq.s32.totalorder %s22, 1
      %p53 = por %p51, %p52
      %p54 = scmp.ne.s32.totalorder %s46, %s49
      %p55 = scmp.eq.s32.totalorder %s22, 0
      %p56 = por %p54, %p55
      %p57 = scmp.ne.s32.totalorder %s46, %s49
      %p58 = scmp.eq.s32.totalorder %s27, 1
      %p59 = por %p57, %p58
      %p60 = scmp.ne.s32.totalorder %s49, %s50
      %p61 = scmp.eq.s32.totalorder %s27, 0
      %p62 = por %p60, %p61
      %p63 = scmp.ne.s32.totalorder %s49, %s50
      %p64 = scmp.eq.s32.totalorder %s28, 1
      %p65 = por %p63, %p64
      %p67 = scmp.ne.s32.totalorder %s50, %s66
      %p68 = scmp.eq.s32.totalorder %s28, 0
      %p69 = por %p67, %p68
      %s70 = sld [smem:[#allocation3 + %s29]]
      %s71 = sld [smem:[#allocation3 + %s41]]
      %s72 = ssub.s32 %s70, %s71
      %s73 = ssub.s32 %s30, %s37
      %s74 = sor.u32 %s72, %s73
      %p75 = scmp.eq.s32.totalorder %s74, 0
      %s77 = sadd.s32 %s76, 1
      %s78 = scalar_select %p75, %s76, %s77
      %p81 = pneg %p75
      %p82 = scmp.eq.s32.totalorder %s22, 1
      %p83 = por %p81, %p82
      %p84 = scmp.ne.s32.totalorder %s76, %s79
      %p85 = scmp.eq.s32.totalorder %s22, 0
      %p86 = por %p84, %p85
      %p87 = scmp.ne.s32.totalorder %s76, %s79
      %p88 = scmp.eq.s32.totalorder %s27, 1
      %p89 = por %p87, %p88
      %p90 = scmp.ne.s32.totalorder %s79, %s80
      %p91 = scmp.eq.s32.totalorder %s27, 0
      %p92 = por %p90, %p91
      %p93 = scmp.ne.s32.totalorder %s79, %s80
      %p94 = scmp.eq.s32.totalorder %s28, 1
      %p95 = por %p93, %p94
      %p97 = scmp.ne.s32.totalorder %s80, %s96
      %p98 = scmp.eq.s32.totalorder %s28, 0
      %p99 = por %p97, %p98
      %s100 = ssub.s32 %s29, %s41
      %s101 = ssub.s32 %s30, %s37
      %s102 = sor.u32 %s100, %s101
      %p103 = scmp.eq.s32.totalorder %s102, 0
      %s105 = sadd.s32 %s104, 1
      %s106 = scalar_select %p103, %s104, %s105
      %p109 = pneg %p103
      %p110 = scmp.eq.s32.totalorder %s22, 1
      %p111 = por %p109, %p110
      %p112 = scmp.ne.s32.totalorder %s104, %s107
      %p113 = scmp.eq.s32.totalorder %s22, 0
      %p114 = por %p112, %p113
      %p115 = scmp.ne.s32.totalorder %s104, %s107
      %p116 = scmp.eq.s32.totalorder %s27, 1
      %p117 = por %p115, %p116
      %p118 = scmp.ne.s32.totalorder %s107, %s108
      %p119 = scmp.eq.s32.totalorder %s27, 0
      %p120 = por %p118, %p119
      %p121 = scmp.ne.s32.totalorder %s107, %s108
      %p122 = scmp.eq.s32.totalorder %s28, 1
      %p123 = por %p121, %p122
      %p125 = scmp.ne.s32.totalorder %s108, %s124
      %p126 = scmp.eq.s32.totalorder %s28, 0
      %p127 = por %p125, %p126
      %s128 = ssub.s32 %s29, %s41
      %s129 = ssub.s32 %s30, %s37
      %s130 = sor.u32 %s128, %s129
      %p131 = scmp.eq.s32.totalorder %s130, 0
      %s133 = sadd.s32 %s132, 1
      %s134 = scalar_select %p131, %s132, %s133
      %p137 = pneg %p131
      %p138 = scmp.eq.s32.totalorder %s22, 1
      %p139 = por %p137, %p138
      %p140 = scmp.ne.s32.totalorder %s132, %s135
      %p141 = scmp.eq.s32.totalorder %s22, 0
      %p142 = por %p140, %p141
      %p143 = scmp.ne.s32.totalorder %s132, %s135
      %p144 = scmp.eq.s32.totalorder %s27, 1
      %p145 = por %p143, %p144
      %p146 = scmp.ne.s32.totalorder %s135, %s136
      %p147 = scmp.eq.s32.totalorder %s27, 0
      %p148 = por %p146, %p147
      %p149 = scmp.ne.s32.totalorder %s135, %s136
      %p150 = scmp.eq.s32.totalorder %s28, 1
      %p151 = por %p149, %p150
      %p153 = scmp.ne.s32.totalorder %s136, %s152
      %p154 = scmp.eq.s32.totalorder %s28, 0
      %p155 = por %p153, %p154
      %p156 = scmp.le.s32.totalorder 1, %s22
      %p157 = scmp.lt.s32.totalorder %s22, 3
      %p158 = pnand %p156, %p157
      %p159 = pneg %p158
      // Predicated region
      $region9: #{tpu_custom_call.1} parent=5 // pred_check
        _
      $region10: #{tpu_custom_call.1} parent=5 // pred_check_branch
        %161 = sbr.rel (%p158) target = $region12
      $region11: #{tpu_custom_call.1} parent=5 // pred_region
        %s162 = ssub.s32 %s22, 1
      $region12: #{tpu_custom_call.1} parent=5 // pred_fallthru
        _
      %p163 = scmp.lt.s32.totalorder %s22, 2
      // Predicated region
      $region13: #{tpu_custom_call.1} parent=5 // pred_check
        %p164 = pneg %p163
      $region14: #{tpu_custom_call.1} parent=5 // pred_check_branch
        %166 = sbr.rel (%p164) target = $region16
      $region15: #{tpu_custom_call.1} parent=5 // pred_region
        // Predicated region
        $region17: #{tpu_custom_call.1} parent=15 // pred_check
          %p167 = pneg %p56
        $region18: #{tpu_custom_call.1} parent=15 // pred_check_branch
          %169 = sbr.rel (%p167) target = $region20
        $region19: #{tpu_custom_call.1} parent=15 // pred_region
          %s170 = smul.u32 64, %s30
          %p171 = scmp.lt.s32.totalorder %s29, 1
          %s172 = scalar_select %p171, %s29, 1
          %p173 = scmp.lt.s32.totalorder %s170, 63
          %s174 = scalar_select %p173, %s170, 63
          %s175 = smul.addr %s172, 64
          %s176 = sadd.s32 %s174, %s175
          %s177 = smul.addr %s176, 8
          %s178 = scalar_lea.vmem %s1, %s177
          %s179 = smul.u32 64, %s30
        $region20: #{tpu_custom_call.1} parent=15 // pred_fallthru
          _
        // Predicated region
        $region21: #{tpu_custom_call.1} parent=15 // pred_check
          %p180 = pneg %p86
        $region22: #{tpu_custom_call.1} parent=15 // pred_check_branch
          %182 = sbr.rel (%p180) target = $region24
        $region23: #{tpu_custom_call.1} parent=15 // pred_region
          %s183 = sand.u32 %s76, 1
          %s184 = scalar_lea.sflag [#allocation5], %s183
          %s185 = sand.u32 %s76, 1
          %s186 = smul.addr %s185, 512
          %s187 = scalar_lea.vmem [#allocation4], %s186
          %s188 = sld [smem:[#allocation3 + %s29]]
          %s189 = smul.u32 64, %s30
          %s191 = ssub.s32 8192, 8192
          %192 = vsyncadd %s184, %s191
          %s193 = smul.addr %s188, 64
          %s194 = sadd.s32 %s189, %s193
          %s195 = smul.addr %s194, 128
          %s196 = scalar_lea.hbm %s2, %s195
          %s197 = sshll.u32 %s187, 4
          %s198 = int_to_ptr.vmem [resolvable:$true] %s197
          %203 = dma.hbm_to_vmem [thread:$0]  %s196, 8192, %s198, %s184, 128, 128, 8
        $region24: #{tpu_custom_call.1} parent=15 // pred_fallthru
          _
        // Predicated region
        $region25: #{tpu_custom_call.1} parent=15 // pred_check
          %p204 = pneg %p114
        $region26: #{tpu_custom_call.1} parent=15 // pred_check_branch
          %206 = sbr.rel (%p204) target = $region28
        $region27: #{tpu_custom_call.1} parent=15 // pred_region
          %s207 = smul.u32 64, %s30
          %p208 = scmp.lt.s32.totalorder %s29, 1
          %s209 = scalar_select %p208, %s29, 1
          %p210 = scmp.lt.s32.totalorder %s207, 63
          %s211 = scalar_select %p210, %s207, 63
          %s212 = smul.addr %s209, 64
          %s213 = sadd.s32 %s211, %s212
          %s214 = smul.addr %s213, 8
          %s215 = scalar_lea.vmem %s3, %s214
          %s216 = smul.u32 64, %s30
        $region28: #{tpu_custom_call.1} parent=15 // pred_fallthru
          _
      $region16: #{tpu_custom_call.1} parent=5 // pred_fallthru
        _
      %p217 = scmp.le.s32.totalorder 1, %s22
      %p218 = scmp.lt.s32.totalorder %s22, 3
      %p219 = pnand %p217, %p218
      %p220 = pneg %p219
      // Predicated region
      $region29: #{tpu_custom_call.1} parent=5 // pred_check
        _
      $region30: #{tpu_custom_call.1} parent=5 // pred_check_branch
        %222 = sbr.rel (%p219) target = $region32
      $region31: #{tpu_custom_call.1} parent=5 // pred_region
        %s223 = ssub.s32 %s22, 1
        %s224 = sand.u32 %s79, 1
        %s225 = scalar_lea.sflag [#allocation5], %s224
        %s226 = sand.u32 %s79, 1
        %s227 = smul.addr %s226, 512
        %s228 = scalar_lea.vmem [#allocation4], %s227
        // Predicated region
        $region33: #{tpu_custom_call.1} parent=31 // pred_check
          %p229 = pneg %p92
        $region34: #{tpu_custom_call.1} parent=31 // pred_check_branch
          %231 = sbr.rel (%p229) target = $region36
        $region35: #{tpu_custom_call.1} parent=31 // pred_region
          %232 = dma.done %s225, 8192
        $region36: #{tpu_custom_call.1} parent=31 // pred_fallthru
          _
        %s233 = smul.u32 64, %s32
        %p234 = scmp.lt.s32.totalorder %s31, 1
        %s235 = scalar_select %p234, %s31, 1
        %p236 = scmp.lt.s32.totalorder %s233, 63
        %s237 = scalar_select %p236, %s233, 63
        %s238 = smul.addr %s235, 64
        %s239 = sadd.s32 %s237, %s238
        %s240 = smul.addr %s239, 8
        %s241 = scalar_lea.vmem %s1, %s240
        %p242 = pneg %p62
        %p243 = pneg %p59
        %s244 = sand.u32 %s79, 1
        %s245 = scalar_lea.sflag [#allocation5], %s244
        %s246 = sand.u32 %s79, 1
        %s247 = smul.addr %s246, 512
        %s248 = scalar_lea.vmem [#allocation4], %s247
        %p249 = pneg %p92
        %p250 = pneg %p89
        %s251 = smul.u32 64, %s32
        %p252 = scmp.lt.s32.totalorder %s31, 1
        %s253 = scalar_select %p252, %s31, 1
        %p254 = scmp.lt.s32.totalorder %s251, 63
        %s255 = scalar_select %p254, %s251, 63
        %s256 = smul.addr %s253, 64
        %s257 = sadd.s32 %s255, %s256
        %s258 = smul.addr %s257, 8
        %s259 = scalar_lea.vmem %s3, %s258
        %p260 = pneg %p120
        %p261 = pneg %p117
        %p262 = pneg %p148
        %p263 = pneg %p145
        %s264 = sand.u32 %s135, 1
        %s265 = scalar_lea.sflag [#allocation6], %s264
        %s266 = sand.u32 %s135, 1
        %s267 = smul.addr %s266, 512
        %s268 = scalar_lea.vmem [#allocation7], %s267
        %s269 = smul.u32 64, %s32
        %p270 = scmp.lt.s32.totalorder %s31, 1
        %s271 = scalar_select %p270, %s31, 1
        %p272 = scmp.lt.s32.totalorder %s269, 63
        %s273 = scalar_select %p272, %s269, 63
        %s274 = smul.addr %s271, 64
        %s275 = sadd.s32 %s273, %s274
        %s276 = smul.addr %s275, 8
        %s277 = scalar_lea.vmem %s1, %s276
        %s278 = smul.u32 64, %s32
        %s279 = sld [smem:[#allocation3 + %s31]]
        %s280 = smul.u32 64, %s32
        %s281 = smul.u32 64, %s32
        %p282 = scmp.lt.s32.totalorder %s31, 1
        %s283 = scalar_select %p282, %s31, 1
        %p284 = scmp.lt.s32.totalorder %s281, 63
        %s285 = scalar_select %p284, %s281, 63
        %s286 = smul.addr %s283, 64
        %s287 = sadd.s32 %s285, %s286
        %s288 = smul.addr %s287, 8
        %s289 = scalar_lea.vmem %s3, %s288
        %s290 = smul.u32 64, %s32
        %s291 = smul.u32 64, %s32
        %v292 = vld [vmem:[%s277] sm:$0xff]
        %v293 = vld [vmem:[%s277 + $0x8] sm:$0xff]
        %v294 = vld [vmem:[%s277 + $0x10] sm:$0xff]
        %v295 = vld [vmem:[%s277 + $0x18] sm:$0xff]
        %v296 = vld [vmem:[%s277 + $0x20] sm:$0xff]
        %v297 = vld [vmem:[%s277 + $0x28] sm:$0xff]
        %v298 = vld [vmem:[%s277 + $0x30] sm:$0xff]
        %v299 = vld [vmem:[%s277 + $0x38] sm:$0xff]
        %v300 = vld [vmem:[%s277 + $0x40] sm:$0xff]
        %v301 = vld [vmem:[%s277 + $0x48] sm:$0xff]
        %v302 = vld [vmem:[%s277 + $0x50] sm:$0xff]
        %v303 = vld [vmem:[%s277 + $0x58] sm:$0xff]
        %v304 = vld [vmem:[%s277 + $0x60] sm:$0xff]
        %v305 = vld [vmem:[%s277 + $0x68] sm:$0xff]
        %v306 = vld [vmem:[%s277 + $0x70] sm:$0xff]
        %v307 = vld [vmem:[%s277 + $0x78] sm:$0xff]
        %v308 = vld [vmem:[%s277 + $0x80] sm:$0xff]
        %v309 = vld [vmem:[%s277 + $0x88] sm:$0xff]
        %v310 = vld [vmem:[%s277 + $0x90] sm:$0xff]
        %v311 = vld [vmem:[%s277 + $0x98] sm:$0xff]
        %v312 = vld [vmem:[%s277 + $0xa0] sm:$0xff]
        %v313 = vld [vmem:[%s277 + $0xa8] sm:$0xff]
        %v314 = vld [vmem:[%s277 + $0xb0] sm:$0xff]
        %v315 = vld [vmem:[%s277 + $0xb8] sm:$0xff]
        %v316 = vld [vmem:[%s277 + $0xc0] sm:$0xff]
        %v317 = vld [vmem:[%s277 + $0xc8] sm:$0xff]
        %v318 = vld [vmem:[%s277 + $0xd0] sm:$0xff]
        %v319 = vld [vmem:[%s277 + $0xd8] sm:$0xff]
        %v320 = vld [vmem:[%s277 + $0xe0] sm:$0xff]
        %v321 = vld [vmem:[%s277 + $0xe8] sm:$0xff]
        %v322 = vld [vmem:[%s277 + $0xf0] sm:$0xff]
        %v323 = vld [vmem:[%s277 + $0xf8] sm:$0xff]
        %v324 = vld [vmem:[%s277 + $0x100] sm:$0xff]
        %v325 = vld [vmem:[%s277 + $0x108] sm:$0xff]
        %v326 = vld [vmem:[%s277 + $0x110] sm:$0xff]
        %v327 = vld [vmem:[%s277 + $0x118] sm:$0xff]
        %v328 = vld [vmem:[%s277 + $0x120] sm:$0xff]
        %v329 = vld [vmem:[%s277 + $0x128] sm:$0xff]
        %v330 = vld [vmem:[%s277 + $0x130] sm:$0xff]
        %v331 = vld [vmem:[%s277 + $0x138] sm:$0xff]
        %v332 = vld [vmem:[%s277 + $0x140] sm:$0xff]
        %v333 = vld [vmem:[%s277 + $0x148] sm:$0xff]
        %v334 = vld [vmem:[%s277 + $0x150] sm:$0xff]
        %v335 = vld [vmem:[%s277 + $0x158] sm:$0xff]
        %v336 = vld [vmem:[%s277 + $0x160] sm:$0xff]
        %v337 = vld [vmem:[%s277 + $0x168] sm:$0xff]
        %v338 = vld [vmem:[%s277 + $0x170] sm:$0xff]
        %v339 = vld [vmem:[%s277 + $0x178] sm:$0xff]
        %v340 = vld [vmem:[%s277 + $0x180] sm:$0xff]
        %v341 = vld [vmem:[%s277 + $0x188] sm:$0xff]
        %v342 = vld [vmem:[%s277 + $0x190] sm:$0xff]
        %v343 = vld [vmem:[%s277 + $0x198] sm:$0xff]
        %v344 = vld [vmem:[%s277 + $0x1a0] sm:$0xff]
        %v345 = vld [vmem:[%s277 + $0x1a8] sm:$0xff]
        %v346 = vld [vmem:[%s277 + $0x1b0] sm:$0xff]
        %v347 = vld [vmem:[%s277 + $0x1b8] sm:$0xff]
        %v348 = vld [vmem:[%s277 + $0x1c0] sm:$0xff]
        %v349 = vld [vmem:[%s277 + $0x1c8] sm:$0xff]
        %v350 = vld [vmem:[%s277 + $0x1d0] sm:$0xff]
        %v351 = vld [vmem:[%s277 + $0x1d8] sm:$0xff]
        %v352 = vld [vmem:[%s277 + $0x1e0] sm:$0xff]
        %v353 = vld [vmem:[%s277 + $0x1e8] sm:$0xff]
        %v354 = vld [vmem:[%s277 + $0x1f0] sm:$0xff]
        %v355 = vld [vmem:[%s277 + $0x1f8] sm:$0xff]
        %v356 = vld [vmem:[%s228] sm:$0xff]
        %v357 = vld [vmem:[%s228 + $0x8] sm:$0xff]
        %v358 = vld [vmem:[%s228 + $0x10] sm:$0xff]
        %v359 = vld [vmem:[%s228 + $0x18] sm:$0xff]
        %v360 = vld [vmem:[%s228 + $0x20] sm:$0xff]
        %v361 = vld [vmem:[%s228 + $0x28] sm:$0xff]
        %v362 = vld [vmem:[%s228 + $0x30] sm:$0xff]
        %v363 = vld [vmem:[%s228 + $0x38] sm:$0xff]
        %v364 = vld [vmem:[%s228 + $0x40] sm:$0xff]
        %v365 = vld [vmem:[%s228 + $0x48] sm:$0xff]
        %v366 = vld [vmem:[%s228 + $0x50] sm:$0xff]
        %v367 = vld [vmem:[%s228 + $0x58] sm:$0xff]
        %v368 = vld [vmem:[%s228 + $0x60] sm:$0xff]
        %v369 = vld [vmem:[%s228 + $0x68] sm:$0xff]
        %v370 = vld [vmem:[%s228 + $0x70] sm:$0xff]
        %v371 = vld [vmem:[%s228 + $0x78] sm:$0xff]
        %v372 = vld [vmem:[%s228 + $0x80] sm:$0xff]
        %v373 = vld [vmem:[%s228 + $0x88] sm:$0xff]
        %v374 = vld [vmem:[%s228 + $0x90] sm:$0xff]
        %v375 = vld [vmem:[%s228 + $0x98] sm:$0xff]
        %v376 = vld [vmem:[%s228 + $0xa0] sm:$0xff]
        %v377 = vld [vmem:[%s228 + $0xa8] sm:$0xff]
        %v378 = vld [vmem:[%s228 + $0xb0] sm:$0xff]
        %v379 = vld [vmem:[%s228 + $0xb8] sm:$0xff]
        %v380 = vld [vmem:[%s228 + $0xc0] sm:$0xff]
        %v381 = vld [vmem:[%s228 + $0xc8] sm:$0xff]
        %v382 = vld [vmem:[%s228 + $0xd0] sm:$0xff]
        %v383 = vld [vmem:[%s228 + $0xd8] sm:$0xff]
        %v384 = vld [vmem:[%s228 + $0xe0] sm:$0xff]
        %v385 = vld [vmem:[%s228 + $0xe8] sm:$0xff]
        %v386 = vld [vmem:[%s228 + $0xf0] sm:$0xff]
        %v387 = vld [vmem:[%s228 + $0xf8] sm:$0xff]
        %v388 = vld [vmem:[%s228 + $0x100] sm:$0xff]
        %v389 = vld [vmem:[%s228 + $0x108] sm:$0xff]
        %v390 = vld [vmem:[%s228 + $0x110] sm:$0xff]
        %v391 = vld [vmem:[%s228 + $0x118] sm:$0xff]
        %v392 = vld [vmem:[%s228 + $0x120] sm:$0xff]
        %v393 = vld [vmem:[%s228 + $0x128] sm:$0xff]
        %v394 = vld [vmem:[%s228 + $0x130] sm:$0xff]
        %v395 = vld [vmem:[%s228 + $0x138] sm:$0xff]
        %v396 = vld [vmem:[%s228 + $0x140] sm:$0xff]
        %v397 = vld [vmem:[%s228 + $0x148] sm:$0xff]
        %v398 = vld [vmem:[%s228 + $0x150] sm:$0xff]
        %v399 = vld [vmem:[%s228 + $0x158] sm:$0xff]
        %v400 = vld [vmem:[%s228 + $0x160] sm:$0xff]
        %v401 = vld [vmem:[%s228 + $0x168] sm:$0xff]
        %v402 = vld [vmem:[%s228 + $0x170] sm:$0xff]
        %v403 = vld [vmem:[%s228 + $0x178] sm:$0xff]
        %v404 = vld [vmem:[%s228 + $0x180] sm:$0xff]
        %v405 = vld [vmem:[%s228 + $0x188] sm:$0xff]
        %v406 = vld [vmem:[%s228 + $0x190] sm:$0xff]
        %v407 = vld [vmem:[%s228 + $0x198] sm:$0xff]
        %v408 = vld [vmem:[%s228 + $0x1a0] sm:$0xff]
        %v409 = vld [vmem:[%s228 + $0x1a8] sm:$0xff]
        %v410 = vld [vmem:[%s228 + $0x1b0] sm:$0xff]
        %v411 = vld [vmem:[%s228 + $0x1b8] sm:$0xff]
        %v412 = vld [vmem:[%s228 + $0x1c0] sm:$0xff]
        %v413 = vld [vmem:[%s228 + $0x1c8] sm:$0xff]
        %v414 = vld [vmem:[%s228 + $0x1d0] sm:$0xff]
        %v415 = vld [vmem:[%s228 + $0x1d8] sm:$0xff]
        %v416 = vld [vmem:[%s228 + $0x1e0] sm:$0xff]
        %v417 = vld [vmem:[%s228 + $0x1e8] sm:$0xff]
        %v418 = vld [vmem:[%s228 + $0x1f0] sm:$0xff]
        %v419 = vld [vmem:[%s228 + $0x1f8] sm:$0xff]
        %v420 = vld [vmem:[%s289] sm:$0xff]
        %v421 = vld [vmem:[%s289 + $0x8] sm:$0xff]
        %v422 = vld [vmem:[%s289 + $0x10] sm:$0xff]
        %v423 = vld [vmem:[%s289 + $0x18] sm:$0xff]
        %v424 = vld [vmem:[%s289 + $0x20] sm:$0xff]
        %v425 = vld [vmem:[%s289 + $0x28] sm:$0xff]
        %v426 = vld [vmem:[%s289 + $0x30] sm:$0xff]
        %v427 = vld [vmem:[%s289 + $0x38] sm:$0xff]
        %v428 = vld [vmem:[%s289 + $0x40] sm:$0xff]
        %v429 = vld [vmem:[%s289 + $0x48] sm:$0xff]
        %v430 = vld [vmem:[%s289 + $0x50] sm:$0xff]
        %v431 = vld [vmem:[%s289 + $0x58] sm:$0xff]
        %v432 = vld [vmem:[%s289 + $0x60] sm:$0xff]
        %v433 = vld [vmem:[%s289 + $0x68] sm:$0xff]
        %v434 = vld [vmem:[%s289 + $0x70] sm:$0xff]
        %v435 = vld [vmem:[%s289 + $0x78] sm:$0xff]
        %v436 = vld [vmem:[%s289 + $0x80] sm:$0xff]
        %v437 = vld [vmem:[%s289 + $0x88] sm:$0xff]
        %v438 = vld [vmem:[%s289 + $0x90] sm:$0xff]
        %v439 = vld [vmem:[%s289 + $0x98] sm:$0xff]
        %v440 = vld [vmem:[%s289 + $0xa0] sm:$0xff]
        %v441 = vld [vmem:[%s289 + $0xa8] sm:$0xff]
        %v442 = vld [vmem:[%s289 + $0xb0] sm:$0xff]
        %v443 = vld [vmem:[%s289 + $0xb8] sm:$0xff]
        %v444 = vld [vmem:[%s289 + $0xc0] sm:$0xff]
        %v445 = vld [vmem:[%s289 + $0xc8] sm:$0xff]
        %v446 = vld [vmem:[%s289 + $0xd0] sm:$0xff]
        %v447 = vld [vmem:[%s289 + $0xd8] sm:$0xff]
        %v448 = vld [vmem:[%s289 + $0xe0] sm:$0xff]
        %v449 = vld [vmem:[%s289 + $0xe8] sm:$0xff]
        %v450 = vld [vmem:[%s289 + $0xf0] sm:$0xff]
        %v451 = vld [vmem:[%s289 + $0xf8] sm:$0xff]
        %v452 = vld [vmem:[%s289 + $0x100] sm:$0xff]
        %v453 = vld [vmem:[%s289 + $0x108] sm:$0xff]
        %v454 = vld [vmem:[%s289 + $0x110] sm:$0xff]
        %v455 = vld [vmem:[%s289 + $0x118] sm:$0xff]
        %v456 = vld [vmem:[%s289 + $0x120] sm:$0xff]
        %v457 = vld [vmem:[%s289 + $0x128] sm:$0xff]
        %v458 = vld [vmem:[%s289 + $0x130] sm:$0xff]
        %v459 = vld [vmem:[%s289 + $0x138] sm:$0xff]
        %v460 = vld [vmem:[%s289 + $0x140] sm:$0xff]
        %v461 = vld [vmem:[%s289 + $0x148] sm:$0xff]
        %v462 = vld [vmem:[%s289 + $0x150] sm:$0xff]
        %v463 = vld [vmem:[%s289 + $0x158] sm:$0xff]
        %v464 = vld [vmem:[%s289 + $0x160] sm:$0xff]
        %v465 = vld [vmem:[%s289 + $0x168] sm:$0xff]
        %v466 = vld [vmem:[%s289 + $0x170] sm:$0xff]
        %v467 = vld [vmem:[%s289 + $0x178] sm:$0xff]
        %v468 = vld [vmem:[%s289 + $0x180] sm:$0xff]
        %v469 = vld [vmem:[%s289 + $0x188] sm:$0xff]
        %v470 = vld [vmem:[%s289 + $0x190] sm:$0xff]
        %v471 = vld [vmem:[%s289 + $0x198] sm:$0xff]
        %v472 = vld [vmem:[%s289 + $0x1a0] sm:$0xff]
        %v473 = vld [vmem:[%s289 + $0x1a8] sm:$0xff]
        %v474 = vld [vmem:[%s289 + $0x1b0] sm:$0xff]
        %v475 = vld [vmem:[%s289 + $0x1b8] sm:$0xff]
        %v476 = vld [vmem:[%s289 + $0x1c0] sm:$0xff]
        %v477 = vld [vmem:[%s289 + $0x1c8] sm:$0xff]
        %v478 = vld [vmem:[%s289 + $0x1d0] sm:$0xff]
        %v479 = vld [vmem:[%s289 + $0x1d8] sm:$0xff]
        %v480 = vld [vmem:[%s289 + $0x1e0] sm:$0xff]
        %v481 = vld [vmem:[%s289 + $0x1e8] sm:$0xff]
        %v482 = vld [vmem:[%s289 + $0x1f0] sm:$0xff]
        %v483 = vld [vmem:[%s289 + $0x1f8] sm:$0xff]
        %v484 = vmul.f32 %v292, %v292
        %v485 = vmul.f32 %v293, %v293
        %v486 = vmul.f32 %v294, %v294
        %v487 = vmul.f32 %v295, %v295
        %v488 = vmul.f32 %v296, %v296
        %v489 = vmul.f32 %v297, %v297
        %v490 = vmul.f32 %v298, %v298
        %v491 = vmul.f32 %v299, %v299
        %v492 = vmul.f32 %v300, %v300
        %v493 = vmul.f32 %v301, %v301
        %v494 = vmul.f32 %v302, %v302
        %v495 = vmul.f32 %v303, %v303
        %v496 = vmul.f32 %v304, %v304
        %v497 = vmul.f32 %v305, %v305
        %v498 = vmul.f32 %v306, %v306
        %v499 = vmul.f32 %v307, %v307
        %v500 = vmul.f32 %v308, %v308
        %v501 = vmul.f32 %v309, %v309
        %v502 = vmul.f32 %v310, %v310
        %v503 = vmul.f32 %v311, %v311
        %v504 = vmul.f32 %v312, %v312
        %v505 = vmul.f32 %v313, %v313
        %v506 = vmul.f32 %v314, %v314
        %v507 = vmul.f32 %v315, %v315
        %v508 = vmul.f32 %v316, %v316
        %v509 = vmul.f32 %v317, %v317
        %v510 = vmul.f32 %v318, %v318
        %v511 = vmul.f32 %v319, %v319
        %v512 = vmul.f32 %v320, %v320
        %v513 = vmul.f32 %v321, %v321
        %v514 = vmul.f32 %v322, %v322
        %v515 = vmul.f32 %v323, %v323
        %v516 = vmul.f32 %v324, %v324
        %v517 = vmul.f32 %v325, %v325
        %v518 = vmul.f32 %v326, %v326
        %v519 = vmul.f32 %v327, %v327
        %v520 = vmul.f32 %v328, %v328
        %v521 = vmul.f32 %v329, %v329
        %v522 = vmul.f32 %v330, %v330
        %v523 = vmul.f32 %v331, %v331
        %v524 = vmul.f32 %v332, %v332
        %v525 = vmul.f32 %v333, %v333
        %v526 = vmul.f32 %v334, %v334
        %v527 = vmul.f32 %v335, %v335
        %v528 = vmul.f32 %v336, %v336
        %v529 = vmul.f32 %v337, %v337
        %v530 = vmul.f32 %v338, %v338
        %v531 = vmul.f32 %v339, %v339
        %v532 = vmul.f32 %v340, %v340
        %v533 = vmul.f32 %v341, %v341
        %v534 = vmul.f32 %v342, %v342
        %v535 = vmul.f32 %v343, %v343
        %v536 = vmul.f32 %v344, %v344
        %v537 = vmul.f32 %v345, %v345
        %v538 = vmul.f32 %v346, %v346
        %v539 = vmul.f32 %v347, %v347
        %v540 = vmul.f32 %v348, %v348
        %v541 = vmul.f32 %v349, %v349
        %v542 = vmul.f32 %v350, %v350
        %v543 = vmul.f32 %v351, %v351
        %v544 = vmul.f32 %v352, %v352
        %v545 = vmul.f32 %v353, %v353
        %v546 = vmul.f32 %v354, %v354
        %v547 = vmul.f32 %v355, %v355
        %548 = vadd.xlane.f32.xlu0 %v484
        %v549 = vpop.xlane.xlu0 %548
        %550 = vadd.xlane.f32.xlu0 %v485
        %v551 = vpop.xlane.xlu0 %550
        %552 = vadd.xlane.f32.xlu0 %v486
        %v553 = vpop.xlane.xlu0 %552
        %554 = vadd.xlane.f32.xlu0 %v487
        %v555 = vpop.xlane.xlu0 %554
        %556 = vadd.xlane.f32.xlu0 %v488
        %v557 = vpop.xlane.xlu0 %556
        %558 = vadd.xlane.f32.xlu0 %v489
        %v559 = vpop.xlane.xlu0 %558
        %560 = vadd.xlane.f32.xlu0 %v490
        %v561 = vpop.xlane.xlu0 %560
        %562 = vadd.xlane.f32.xlu0 %v491
        %v563 = vpop.xlane.xlu0 %562
        %564 = vadd.xlane.f32.xlu0 %v492
        %v565 = vpop.xlane.xlu0 %564
        %566 = vadd.xlane.f32.xlu0 %v493
        %v567 = vpop.xlane.xlu0 %566
        %568 = vadd.xlane.f32.xlu0 %v494
        %v569 = vpop.xlane.xlu0 %568
        %570 = vadd.xlane.f32.xlu0 %v495
        %v571 = vpop.xlane.xlu0 %570
        %572 = vadd.xlane.f32.xlu0 %v496
        %v573 = vpop.xlane.xlu0 %572
        %574 = vadd.xlane.f32.xlu0 %v497
        %v575 = vpop.xlane.xlu0 %574
        %576 = vadd.xlane.f32.xlu0 %v498
        %v577 = vpop.xlane.xlu0 %576
        %578 = vadd.xlane.f32.xlu0 %v499
        %v579 = vpop.xlane.xlu0 %578
        %580 = vadd.xlane.f32.xlu0 %v500
        %v581 = vpop.xlane.xlu0 %580
        %582 = vadd.xlane.f32.xlu0 %v501
        %v583 = vpop.xlane.xlu0 %582
        %584 = vadd.xlane.f32.xlu0 %v502
        %v585 = vpop.xlane.xlu0 %584
        %586 = vadd.xlane.f32.xlu0 %v503
        %v587 = vpop.xlane.xlu0 %586
        %588 = vadd.xlane.f32.xlu0 %v504
        %v589 = vpop.xlane.xlu0 %588
        %590 = vadd.xlane.f32.xlu0 %v505
        %v591 = vpop.xlane.xlu0 %590
        %592 = vadd.xlane.f32.xlu0 %v506
        %v593 = vpop.xlane.xlu0 %592
        %594 = vadd.xlane.f32.xlu0 %v507
        %v595 = vpop.xlane.xlu0 %594
        %596 = vadd.xlane.f32.xlu0 %v508
        %v597 = vpop.xlane.xlu0 %596
        %598 = vadd.xlane.f32.xlu0 %v509
        %v599 = vpop.xlane.xlu0 %598
        %600 = vadd.xlane.f32.xlu0 %v510
        %v601 = vpop.xlane.xlu0 %600
        %602 = vadd.xlane.f32.xlu0 %v511
        %v603 = vpop.xlane.xlu0 %602
        %604 = vadd.xlane.f32.xlu0 %v512
        %v605 = vpop.xlane.xlu0 %604
        %606 = vadd.xlane.f32.xlu0 %v513
        %v607 = vpop.xlane.xlu0 %606
        %608 = vadd.xlane.f32.xlu0 %v514
        %v609 = vpop.xlane.xlu0 %608
        %610 = vadd.xlane.f32.xlu0 %v515
        %v611 = vpop.xlane.xlu0 %610
        %612 = vadd.xlane.f32.xlu0 %v516
        %v613 = vpop.xlane.xlu0 %612
        %614 = vadd.xlane.f32.xlu0 %v517
        %v615 = vpop.xlane.xlu0 %614
        %616 = vadd.xlane.f32.xlu0 %v518
        %v617 = vpop.xlane.xlu0 %616
        %618 = vadd.xlane.f32.xlu0 %v519
        %v619 = vpop.xlane.xlu0 %618
        %620 = vadd.xlane.f32.xlu0 %v520
        %v621 = vpop.xlane.xlu0 %620
        %622 = vadd.xlane.f32.xlu0 %v521
        %v623 = vpop.xlane.xlu0 %622
        %624 = vadd.xlane.f32.xlu0 %v522
        %v625 = vpop.xlane.xlu0 %624
        %626 = vadd.xlane.f32.xlu0 %v523
        %v627 = vpop.xlane.xlu0 %626
        %628 = vadd.xlane.f32.xlu0 %v524
        %v629 = vpop.xlane.xlu0 %628
        %630 = vadd.xlane.f32.xlu0 %v525
        %v631 = vpop.xlane.xlu0 %630
        %632 = vadd.xlane.f32.xlu0 %v526
        %v633 = vpop.xlane.xlu0 %632
        %634 = vadd.xlane.f32.xlu0 %v527
        %v635 = vpop.xlane.xlu0 %634
        %636 = vadd.xlane.f32.xlu0 %v528
        %v637 = vpop.xlane.xlu0 %636
        %638 = vadd.xlane.f32.xlu0 %v529
        %v639 = vpop.xlane.xlu0 %638
        %640 = vadd.xlane.f32.xlu0 %v530
        %v641 = vpop.xlane.xlu0 %640
        %642 = vadd.xlane.f32.xlu0 %v531
        %v643 = vpop.xlane.xlu0 %642
        %644 = vadd.xlane.f32.xlu0 %v532
        %v645 = vpop.xlane.xlu0 %644
        %646 = vadd.xlane.f32.xlu0 %v533
        %v647 = vpop.xlane.xlu0 %646
        %648 = vadd.xlane.f32.xlu0 %v534
        %v649 = vpop.xlane.xlu0 %648
        %650 = vadd.xlane.f32.xlu0 %v535
        %v651 = vpop.xlane.xlu0 %650
        %652 = vadd.xlane.f32.xlu0 %v536
        %v653 = vpop.xlane.xlu0 %652
        %654 = vadd.xlane.f32.xlu0 %v537
        %v655 = vpop.xlane.xlu0 %654
        %656 = vadd.xlane.f32.xlu0 %v538
        %v657 = vpop.xlane.xlu0 %656
        %658 = vadd.xlane.f32.xlu0 %v539
        %v659 = vpop.xlane.xlu0 %658
        %660 = vadd.xlane.f32.xlu0 %v540
        %v661 = vpop.xlane.xlu0 %660
        %662 = vadd.xlane.f32.xlu0 %v541
        %v663 = vpop.xlane.xlu0 %662
        %664 = vadd.xlane.f32.xlu0 %v542
        %v665 = vpop.xlane.xlu0 %664
        %666 = vadd.xlane.f32.xlu0 %v543
        %v667 = vpop.xlane.xlu0 %666
        %668 = vadd.xlane.f32.xlu0 %v544
        %v669 = vpop.xlane.xlu0 %668
        %670 = vadd.xlane.f32.xlu0 %v545
        %v671 = vpop.xlane.xlu0 %670
        %672 = vadd.xlane.f32.xlu0 %v546
        %v673 = vpop.xlane.xlu0 %672
        %674 = vadd.xlane.f32.xlu0 %v547
        %v675 = vpop.xlane.xlu0 %674
        %v676 = vmul.f32 %v356, %v356
        %v677 = vmul.f32 %v357, %v357
        %v678 = vmul.f32 %v358, %v358
        %v679 = vmul.f32 %v359, %v359
        %v680 = vmul.f32 %v360, %v360
        %v681 = vmul.f32 %v361, %v361
        %v682 = vmul.f32 %v362, %v362
        %v683 = vmul.f32 %v363, %v363
        %v684 = vmul.f32 %v364, %v364
        %v685 = vmul.f32 %v365, %v365
        %v686 = vmul.f32 %v366, %v366
        %v687 = vmul.f32 %v367, %v367
        %v688 = vmul.f32 %v368, %v368
        %v689 = vmul.f32 %v369, %v369
        %v690 = vmul.f32 %v370, %v370
        %v691 = vmul.f32 %v371, %v371
        %v692 = vmul.f32 %v372, %v372
        %v693 = vmul.f32 %v373, %v373
        %v694 = vmul.f32 %v374, %v374
        %v695 = vmul.f32 %v375, %v375
        %v696 = vmul.f32 %v376, %v376
        %v697 = vmul.f32 %v377, %v377
        %v698 = vmul.f32 %v378, %v378
        %v699 = vmul.f32 %v379, %v379
        %v700 = vmul.f32 %v380, %v380
        %v701 = vmul.f32 %v381, %v381
        %v702 = vmul.f32 %v382, %v382
        %v703 = vmul.f32 %v383, %v383
        %v704 = vmul.f32 %v384, %v384
        %v705 = vmul.f32 %v385, %v385
        %v706 = vmul.f32 %v386, %v386
        %v707 = vmul.f32 %v387, %v387
        %v708 = vmul.f32 %v388, %v388
        %v709 = vmul.f32 %v389, %v389
        %v710 = vmul.f32 %v390, %v390
        %v711 = vmul.f32 %v391, %v391
        %v712 = vmul.f32 %v392, %v392
        %v713 = vmul.f32 %v393, %v393
        %v714 = vmul.f32 %v394, %v394
        %v715 = vmul.f32 %v395, %v395
        %v716 = vmul.f32 %v396, %v396
        %v717 = vmul.f32 %v397, %v397
        %v718 = vmul.f32 %v398, %v398
        %v719 = vmul.f32 %v399, %v399
        %v720 = vmul.f32 %v400, %v400
        %v721 = vmul.f32 %v401, %v401
        %v722 = vmul.f32 %v402, %v402
        %v723 = vmul.f32 %v403, %v403
        %v724 = vmul.f32 %v404, %v404
        %v725 = vmul.f32 %v405, %v405
        %v726 = vmul.f32 %v406, %v406
        %v727 = vmul.f32 %v407, %v407
        %v728 = vmul.f32 %v408, %v408
        %v729 = vmul.f32 %v409, %v409
        %v730 = vmul.f32 %v410, %v410
        %v731 = vmul.f32 %v411, %v411
        %v732 = vmul.f32 %v412, %v412
        %v733 = vmul.f32 %v413, %v413
        %v734 = vmul.f32 %v414, %v414
        %v735 = vmul.f32 %v415, %v415
        %v736 = vmul.f32 %v416, %v416
        %v737 = vmul.f32 %v417, %v417
        %v738 = vmul.f32 %v418, %v418
        %v739 = vmul.f32 %v419, %v419
        %740 = vadd.xlane.f32.xlu0 %v676
        %v741 = vpop.xlane.xlu0 %740
        %742 = vadd.xlane.f32.xlu0 %v677
        %v743 = vpop.xlane.xlu0 %742
        %744 = vadd.xlane.f32.xlu0 %v678
        %v745 = vpop.xlane.xlu0 %744
        %746 = vadd.xlane.f32.xlu0 %v679
        %v747 = vpop.xlane.xlu0 %746
        %748 = vadd.xlane.f32.xlu0 %v680
        %v749 = vpop.xlane.xlu0 %748
        %750 = vadd.xlane.f32.xlu0 %v681
        %v751 = vpop.xlane.xlu0 %750
        %752 = vadd.xlane.f32.xlu0 %v682
        %v753 = vpop.xlane.xlu0 %752
        %754 = vadd.xlane.f32.xlu0 %v683
        %v755 = vpop.xlane.xlu0 %754
        %756 = vadd.xlane.f32.xlu0 %v684
        %v757 = vpop.xlane.xlu0 %756
        %758 = vadd.xlane.f32.xlu0 %v685
        %v759 = vpop.xlane.xlu0 %758
        %760 = vadd.xlane.f32.xlu0 %v686
        %v761 = vpop.xlane.xlu0 %760
        %762 = vadd.xlane.f32.xlu0 %v687
        %v763 = vpop.xlane.xlu0 %762
        %764 = vadd.xlane.f32.xlu0 %v688
        %v765 = vpop.xlane.xlu0 %764
        %766 = vadd.xlane.f32.xlu0 %v689
        %v767 = vpop.xlane.xlu0 %766
        %768 = vadd.xlane.f32.xlu0 %v690
        %v769 = vpop.xlane.xlu0 %768
        %770 = vadd.xlane.f32.xlu0 %v691
        %v771 = vpop.xlane.xlu0 %770
        %772 = vadd.xlane.f32.xlu0 %v692
        %v773 = vpop.xlane.xlu0 %772
        %774 = vadd.xlane.f32.xlu0 %v693
        %v775 = vpop.xlane.xlu0 %774
        %776 = vadd.xlane.f32.xlu0 %v694
        %v777 = vpop.xlane.xlu0 %776
        %778 = vadd.xlane.f32.xlu0 %v695
        %v779 = vpop.xlane.xlu0 %778
        %780 = vadd.xlane.f32.xlu0 %v696
        %v781 = vpop.xlane.xlu0 %780
        %782 = vadd.xlane.f32.xlu0 %v697
        %v783 = vpop.xlane.xlu0 %782
        %784 = vadd.xlane.f32.xlu0 %v698
        %v785 = vpop.xlane.xlu0 %784
        %786 = vadd.xlane.f32.xlu0 %v699
        %v787 = vpop.xlane.xlu0 %786
        %788 = vadd.xlane.f32.xlu0 %v700
        %v789 = vpop.xlane.xlu0 %788
        %790 = vadd.xlane.f32.xlu0 %v701
        %v791 = vpop.xlane.xlu0 %790
        %792 = vadd.xlane.f32.xlu0 %v702
        %v793 = vpop.xlane.xlu0 %792
        %794 = vadd.xlane.f32.xlu0 %v703
        %v795 = vpop.xlane.xlu0 %794
        %796 = vadd.xlane.f32.xlu0 %v704
        %v797 = vpop.xlane.xlu0 %796
        %798 = vadd.xlane.f32.xlu0 %v705
        %v799 = vpop.xlane.xlu0 %798
        %800 = vadd.xlane.f32.xlu0 %v706
        %v801 = vpop.xlane.xlu0 %800
        %802 = vadd.xlane.f32.xlu0 %v707
        %v803 = vpop.xlane.xlu0 %802
        %804 = vadd.xlane.f32.xlu0 %v708
        %v805 = vpop.xlane.xlu0 %804
        %806 = vadd.xlane.f32.xlu0 %v709
        %v807 = vpop.xlane.xlu0 %806
        %808 = vadd.xlane.f32.xlu0 %v710
        %v809 = vpop.xlane.xlu0 %808
        %810 = vadd.xlane.f32.xlu0 %v711
        %v811 = vpop.xlane.xlu0 %810
        %812 = vadd.xlane.f32.xlu0 %v712
        %v813 = vpop.xlane.xlu0 %812
        %814 = vadd.xlane.f32.xlu0 %v713
        %v815 = vpop.xlane.xlu0 %814
        %816 = vadd.xlane.f32.xlu0 %v714
        %v817 = vpop.xlane.xlu0 %816
        %818 = vadd.xlane.f32.xlu0 %v715
        %v819 = vpop.xlane.xlu0 %818
        %820 = vadd.xlane.f32.xlu0 %v716
        %v821 = vpop.xlane.xlu0 %820
        %822 = vadd.xlane.f32.xlu0 %v717
        %v823 = vpop.xlane.xlu0 %822
        %824 = vadd.xlane.f32.xlu0 %v718
        %v825 = vpop.xlane.xlu0 %824
        %826 = vadd.xlane.f32.xlu0 %v719
        %v827 = vpop.xlane.xlu0 %826
        %828 = vadd.xlane.f32.xlu0 %v720
        %v829 = vpop.xlane.xlu0 %828
        %830 = vadd.xlane.f32.xlu0 %v721
        %v831 = vpop.xlane.xlu0 %830
        %832 = vadd.xlane.f32.xlu0 %v722
        %v833 = vpop.xlane.xlu0 %832
        %834 = vadd.xlane.f32.xlu0 %v723
        %v835 = vpop.xlane.xlu0 %834
        %836 = vadd.xlane.f32.xlu0 %v724
        %v837 = vpop.xlane.xlu0 %836
        %838 = vadd.xlane.f32.xlu0 %v725
        %v839 = vpop.xlane.xlu0 %838
        %840 = vadd.xlane.f32.xlu0 %v726
        %v841 = vpop.xlane.xlu0 %840
        %842 = vadd.xlane.f32.xlu0 %v727
        %v843 = vpop.xlane.xlu0 %842
        %844 = vadd.xlane.f32.xlu0 %v728
        %v845 = vpop.xlane.xlu0 %844
        %846 = vadd.xlane.f32.xlu0 %v729
        %v847 = vpop.xlane.xlu0 %846
        %848 = vadd.xlane.f32.xlu0 %v730
        %v849 = vpop.xlane.xlu0 %848
        %850 = vadd.xlane.f32.xlu0 %v731
        %v851 = vpop.xlane.xlu0 %850
        %852 = vadd.xlane.f32.xlu0 %v732
        %v853 = vpop.xlane.xlu0 %852
        %854 = vadd.xlane.f32.xlu0 %v733
        %v855 = vpop.xlane.xlu0 %854
        %856 = vadd.xlane.f32.xlu0 %v734
        %v857 = vpop.xlane.xlu0 %856
        %858 = vadd.xlane.f32.xlu0 %v735
        %v859 = vpop.xlane.xlu0 %858
        %860 = vadd.xlane.f32.xlu0 %v736
        %v861 = vpop.xlane.xlu0 %860
        %862 = vadd.xlane.f32.xlu0 %v737
        %v863 = vpop.xlane.xlu0 %862
        %864 = vadd.xlane.f32.xlu0 %v738
        %v865 = vpop.xlane.xlu0 %864
        %866 = vadd.xlane.f32.xlu0 %v739
        %v867 = vpop.xlane.xlu0 %866
        %v868 = vmul.f32 %v420, 0.23025851
        %v869 = vmul.f32 %v421, 0.23025851
        %v870 = vmul.f32 %v422, 0.23025851
        %v871 = vmul.f32 %v423, 0.23025851
        %v872 = vmul.f32 %v424, 0.23025851
        %v873 = vmul.f32 %v425, 0.23025851
        %v874 = vmul.f32 %v426, 0.23025851
        %v875 = vmul.f32 %v427, 0.23025851
        %v876 = vmul.f32 %v428, 0.23025851
        %v877 = vmul.f32 %v429, 0.23025851
        %v878 = vmul.f32 %v430, 0.23025851
        %v879 = vmul.f32 %v431, 0.23025851
        %v880 = vmul.f32 %v432, 0.23025851
        %v881 = vmul.f32 %v433, 0.23025851
        %v882 = vmul.f32 %v434, 0.23025851
        %v883 = vmul.f32 %v435, 0.23025851
        %v884 = vmul.f32 %v436, 0.23025851
        %v885 = vmul.f32 %v437, 0.23025851
        %v886 = vmul.f32 %v438, 0.23025851
        %v887 = vmul.f32 %v439, 0.23025851
        %v888 = vmul.f32 %v440, 0.23025851
        %v889 = vmul.f32 %v441, 0.23025851
        %v890 = vmul.f32 %v442, 0.23025851
        %v891 = vmul.f32 %v443, 0.23025851
        %v892 = vmul.f32 %v444, 0.23025851
        %v893 = vmul.f32 %v445, 0.23025851
        %v894 = vmul.f32 %v446, 0.23025851
        %v895 = vmul.f32 %v447, 0.23025851
        %v896 = vmul.f32 %v448, 0.23025851
        %v897 = vmul.f32 %v449, 0.23025851
        %v898 = vmul.f32 %v450, 0.23025851
        %v899 = vmul.f32 %v451, 0.23025851
        %v900 = vmul.f32 %v452, 0.23025851
        %v901 = vmul.f32 %v453, 0.23025851
        %v902 = vmul.f32 %v454, 0.23025851
        %v903 = vmul.f32 %v455, 0.23025851
        %v904 = vmul.f32 %v456, 0.23025851
        %v905 = vmul.f32 %v457, 0.23025851
        %v906 = vmul.f32 %v458, 0.23025851
        %v907 = vmul.f32 %v459, 0.23025851
        %v908 = vmul.f32 %v460, 0.23025851
        %v909 = vmul.f32 %v461, 0.23025851
        %v910 = vmul.f32 %v462, 0.23025851
        %v911 = vmul.f32 %v463, 0.23025851
        %v912 = vmul.f32 %v464, 0.23025851
        %v913 = vmul.f32 %v465, 0.23025851
        %v914 = vmul.f32 %v466, 0.23025851
        %v915 = vmul.f32 %v467, 0.23025851
        %v916 = vmul.f32 %v468, 0.23025851
        %v917 = vmul.f32 %v469, 0.23025851
        %v918 = vmul.f32 %v470, 0.23025851
        %v919 = vmul.f32 %v471, 0.23025851
        %v920 = vmul.f32 %v472, 0.23025851
        %v921 = vmul.f32 %v473, 0.23025851
        %v922 = vmul.f32 %v474, 0.23025851
        %v923 = vmul.f32 %v475, 0.23025851
        %v924 = vmul.f32 %v476, 0.23025851
        %v925 = vmul.f32 %v477, 0.23025851
        %v926 = vmul.f32 %v478, 0.23025851
        %v927 = vmul.f32 %v479, 0.23025851
        %v928 = vmul.f32 %v480, 0.23025851
        %v929 = vmul.f32 %v481, 0.23025851
        %v930 = vmul.f32 %v482, 0.23025851
        %v931 = vmul.f32 %v483, 0.23025851
        %v932 = vmul.f32 %v868, 1.442695
        %v933 = vpow.pop %v932
        %v934 = vmul.f32 %v869, 1.442695
        %v935 = vpow.pop %v934
        %v936 = vmul.f32 %v870, 1.442695
        %v937 = vpow.pop %v936
        %v938 = vmul.f32 %v871, 1.442695
        %v939 = vpow.pop %v938
        %v940 = vmul.f32 %v872, 1.442695
        %v941 = vpow.pop %v940
        %v942 = vmul.f32 %v873, 1.442695
        %v943 = vpow.pop %v942
        %v944 = vmul.f32 %v874, 1.442695
        %v945 = vpow.pop %v944
        %v946 = vmul.f32 %v875, 1.442695
        %v947 = vpow.pop %v946
        %v948 = vmul.f32 %v876, 1.442695
        %v949 = vpow.pop %v948
        %v950 = vmul.f32 %v877, 1.442695
        %v951 = vpow.pop %v950
        %v952 = vmul.f32 %v878, 1.442695
        %v953 = vpow.pop %v952
        %v954 = vmul.f32 %v879, 1.442695
        %v955 = vpow.pop %v954
        %v956 = vmul.f32 %v880, 1.442695
        %v957 = vpow.pop %v956
        %v958 = vmul.f32 %v881, 1.442695
        %v959 = vpow.pop %v958
        %v960 = vmul.f32 %v882, 1.442695
        %v961 = vpow.pop %v960
        %v962 = vmul.f32 %v883, 1.442695
        %v963 = vpow.pop %v962
        %v964 = vmul.f32 %v884, 1.442695
        %v965 = vpow.pop %v964
        %v966 = vmul.f32 %v885, 1.442695
        %v967 = vpow.pop %v966
        %v968 = vmul.f32 %v886, 1.442695
        %v969 = vpow.pop %v968
        %v970 = vmul.f32 %v887, 1.442695
        %v971 = vpow.pop %v970
        %v972 = vmul.f32 %v888, 1.442695
        %v973 = vpow.pop %v972
        %v974 = vmul.f32 %v889, 1.442695
        %v975 = vpow.pop %v974
        %v976 = vmul.f32 %v890, 1.442695
        %v977 = vpow.pop %v976
        %v978 = vmul.f32 %v891, 1.442695
        %v979 = vpow.pop %v978
        %v980 = vmul.f32 %v892, 1.442695
        %v981 = vpow.pop %v980
        %v982 = vmul.f32 %v893, 1.442695
        %v983 = vpow.pop %v982
        %v984 = vmul.f32 %v894, 1.442695
        %v985 = vpow.pop %v984
        %v986 = vmul.f32 %v895, 1.442695
        %v987 = vpow.pop %v986
        %v988 = vmul.f32 %v896, 1.442695
        %v989 = vpow.pop %v988
        %v990 = vmul.f32 %v897, 1.442695
        %v991 = vpow.pop %v990
        %v992 = vmul.f32 %v898, 1.442695
        %v993 = vpow.pop %v992
        %v994 = vmul.f32 %v899, 1.442695
        %v995 = vpow.pop %v994
        %v996 = vmul.f32 %v900, 1.442695
        %v997 = vpow.pop %v996
        %v998 = vmul.f32 %v901, 1.442695
        %v999 = vpow.pop %v998
        %v1000 = vmul.f32 %v902, 1.442695
        %v1001 = vpow.pop %v1000
        %v1002 = vmul.f32 %v903, 1.442695
        %v1003 = vpow.pop %v1002
        %v1004 = vmul.f32 %v904, 1.442695
        %v1005 = vpow.pop %v1004
        %v1006 = vmul.f32 %v905, 1.442695
        %v1007 = vpow.pop %v1006
        %v1008 = vmul.f32 %v906, 1.442695
        %v1009 = vpow.pop %v1008
        %v1010 = vmul.f32 %v907, 1.442695
        %v1011 = vpow.pop %v1010
        %v1012 = vmul.f32 %v908, 1.442695
        %v1013 = vpow.pop %v1012
        %v1014 = vmul.f32 %v909, 1.442695
        %v1015 = vpow.pop %v1014
        %v1016 = vmul.f32 %v910, 1.442695
        %v1017 = vpow.pop %v1016
        %v1018 = vmul.f32 %v911, 1.442695
        %v1019 = vpow.pop %v1018
        %v1020 = vmul.f32 %v912, 1.442695
        %v1021 = vpow.pop %v1020
        %v1022 = vmul.f32 %v913, 1.442695
        %v1023 = vpow.pop %v1022
        %v1024 = vmul.f32 %v914, 1.442695
        %v1025 = vpow.pop %v1024
        %v1026 = vmul.f32 %v915, 1.442695
        %v1027 = vpow.pop %v1026
        %v1028 = vmul.f32 %v916, 1.442695
        %v1029 = vpow.pop %v1028
        %v1030 = vmul.f32 %v917, 1.442695
        %v1031 = vpow.pop %v1030
        %v1032 = vmul.f32 %v918, 1.442695
        %v1033 = vpow.pop %v1032
        %v1034 = vmul.f32 %v919, 1.442695
        %v1035 = vpow.pop %v1034
        %v1036 = vmul.f32 %v920, 1.442695
        %v1037 = vpow.pop %v1036
        %v1038 = vmul.f32 %v921, 1.442695
        %v1039 = vpow.pop %v1038
        %v1040 = vmul.f32 %v922, 1.442695
        %v1041 = vpow.pop %v1040
        %v1042 = vmul.f32 %v923, 1.442695
        %v1043 = vpow.pop %v1042
        %v1044 = vmul.f32 %v924, 1.442695
        %v1045 = vpow.pop %v1044
        %v1046 = vmul.f32 %v925, 1.442695
        %v1047 = vpow.pop %v1046
        %v1048 = vmul.f32 %v926, 1.442695
        %v1049 = vpow.pop %v1048
        %v1050 = vmul.f32 %v927, 1.442695
        %v1051 = vpow.pop %v1050
        %v1052 = vmul.f32 %v928, 1.442695
        %v1053 = vpow.pop %v1052
        %v1054 = vmul.f32 %v929, 1.442695
        %v1055 = vpow.pop %v1054
        %v1056 = vmul.f32 %v930, 1.442695
        %v1057 = vpow.pop %v1056
        %v1058 = vmul.f32 %v931, 1.442695
        %v1059 = vpow.pop %v1058
        %v1060 = vmul.f32 %v741, %v933
        %v1061 = vmul.f32 %v743, %v935
        %v1062 = vmul.f32 %v745, %v937
        %v1063 = vmul.f32 %v747, %v939
        %v1064 = vmul.f32 %v749, %v941
        %v1065 = vmul.f32 %v751, %v943
        %v1066 = vmul.f32 %v753, %v945
        %v1067 = vmul.f32 %v755, %v947
        %v1068 = vmul.f32 %v757, %v949
        %v1069 = vmul.f32 %v759, %v951
        %v1070 = vmul.f32 %v761, %v953
        %v1071 = vmul.f32 %v763, %v955
        %v1072 = vmul.f32 %v765, %v957
        %v1073 = vmul.f32 %v767, %v959
        %v1074 = vmul.f32 %v769, %v961
        %v1075 = vmul.f32 %v771, %v963
        %v1076 = vmul.f32 %v773, %v965
        %v1077 = vmul.f32 %v775, %v967
        %v1078 = vmul.f32 %v777, %v969
        %v1079 = vmul.f32 %v779, %v971
        %v1080 = vmul.f32 %v781, %v973
        %v1081 = vmul.f32 %v783, %v975
        %v1082 = vmul.f32 %v785, %v977
        %v1083 = vmul.f32 %v787, %v979
        %v1084 = vmul.f32 %v789, %v981
        %v1085 = vmul.f32 %v791, %v983
        %v1086 = vmul.f32 %v793, %v985
        %v1087 = vmul.f32 %v795, %v987
        %v1088 = vmul.f32 %v797, %v989
        %v1089 = vmul.f32 %v799, %v991
        %v1090 = vmul.f32 %v801, %v993
        %v1091 = vmul.f32 %v803, %v995
        %v1092 = vmul.f32 %v805, %v997
        %v1093 = vmul.f32 %v807, %v999
        %v1094 = vmul.f32 %v809, %v1001
        %v1095 = vmul.f32 %v811, %v1003
        %v1096 = vmul.f32 %v813, %v1005
        %v1097 = vmul.f32 %v815, %v1007
        %v1098 = vmul.f32 %v817, %v1009
        %v1099 = vmul.f32 %v819, %v1011
        %v1100 = vmul.f32 %v821, %v1013
        %v1101 = vmul.f32 %v823, %v1015
        %v1102 = vmul.f32 %v825, %v1017
        %v1103 = vmul.f32 %v827, %v1019
        %v1104 = vmul.f32 %v829, %v1021
        %v1105 = vmul.f32 %v831, %v1023
        %v1106 = vmul.f32 %v833, %v1025
        %v1107 = vmul.f32 %v835, %v1027
        %v1108 = vmul.f32 %v837, %v1029
        %v1109 = vmul.f32 %v839, %v1031
        %v1110 = vmul.f32 %v841, %v1033
        %v1111 = vmul.f32 %v843, %v1035
        %v1112 = vmul.f32 %v845, %v1037
        %v1113 = vmul.f32 %v847, %v1039
        %v1114 = vmul.f32 %v849, %v1041
        %v1115 = vmul.f32 %v851, %v1043
        %v1116 = vmul.f32 %v853, %v1045
        %v1117 = vmul.f32 %v855, %v1047
        %v1118 = vmul.f32 %v857, %v1049
        %v1119 = vmul.f32 %v859, %v1051
        %v1120 = vmul.f32 %v861, %v1053
        %v1121 = vmul.f32 %v863, %v1055
        %v1122 = vmul.f32 %v865, %v1057
        %v1123 = vmul.f32 %v867, %v1059
        %v1124 = vrcp.pop %v1060
        %v1125 = vmul.f32 %v549, %v1124
        %v1126 = vrcp.pop %v1061
        %v1127 = vmul.f32 %v551, %v1126
        %v1128 = vrcp.pop %v1062
        %v1129 = vmul.f32 %v553, %v1128
        %v1130 = vrcp.pop %v1063
        %v1131 = vmul.f32 %v555, %v1130
        %v1132 = vrcp.pop %v1064
        %v1133 = vmul.f32 %v557, %v1132
        %v1134 = vrcp.pop %v1065
        %v1135 = vmul.f32 %v559, %v1134
        %v1136 = vrcp.pop %v1066
        %v1137 = vmul.f32 %v561, %v1136
        %v1138 = vrcp.pop %v1067
        %v1139 = vmul.f32 %v563, %v1138
        %v1140 = vrcp.pop %v1068
        %v1141 = vmul.f32 %v565, %v1140
        %v1142 = vrcp.pop %v1069
        %v1143 = vmul.f32 %v567, %v1142
        %v1144 = vrcp.pop %v1070
        %v1145 = vmul.f32 %v569, %v1144
        %v1146 = vrcp.pop %v1071
        %v1147 = vmul.f32 %v571, %v1146
        %v1148 = vrcp.pop %v1072
        %v1149 = vmul.f32 %v573, %v1148
        %v1150 = vrcp.pop %v1073
        %v1151 = vmul.f32 %v575, %v1150
        %v1152 = vrcp.pop %v1074
        %v1153 = vmul.f32 %v577, %v1152
        %v1154 = vrcp.pop %v1075
        %v1155 = vmul.f32 %v579, %v1154
        %v1156 = vrcp.pop %v1076
        %v1157 = vmul.f32 %v581, %v1156
        %v1158 = vrcp.pop %v1077
        %v1159 = vmul.f32 %v583, %v1158
        %v1160 = vrcp.pop %v1078
        %v1161 = vmul.f32 %v585, %v1160
        %v1162 = vrcp.pop %v1079
        %v1163 = vmul.f32 %v587, %v1162
        %v1164 = vrcp.pop %v1080
        %v1165 = vmul.f32 %v589, %v1164
        %v1166 = vrcp.pop %v1081
        %v1167 = vmul.f32 %v591, %v1166
        %v1168 = vrcp.pop %v1082
        %v1169 = vmul.f32 %v593, %v1168
        %v1170 = vrcp.pop %v1083
        %v1171 = vmul.f32 %v595, %v1170
        %v1172 = vrcp.pop %v1084
        %v1173 = vmul.f32 %v597, %v1172
        %v1174 = vrcp.pop %v1085
        %v1175 = vmul.f32 %v599, %v1174
        %v1176 = vrcp.pop %v1086
        %v1177 = vmul.f32 %v601, %v1176
        %v1178 = vrcp.pop %v1087
        %v1179 = vmul.f32 %v603, %v1178
        %v1180 = vrcp.pop %v1088
        %v1181 = vmul.f32 %v605, %v1180
        %v1182 = vrcp.pop %v1089
        %v1183 = vmul.f32 %v607, %v1182
        %v1184 = vrcp.pop %v1090
        %v1185 = vmul.f32 %v609, %v1184
        %v1186 = vrcp.pop %v1091
        %v1187 = vmul.f32 %v611, %v1186
        %v1188 = vrcp.pop %v1092
        %v1189 = vmul.f32 %v613, %v1188
        %v1190 = vrcp.pop %v1093
        %v1191 = vmul.f32 %v615, %v1190
        %v1192 = vrcp.pop %v1094
        %v1193 = vmul.f32 %v617, %v1192
        %v1194 = vrcp.pop %v1095
        %v1195 = vmul.f32 %v619, %v1194
        %v1196 = vrcp.pop %v1096
        %v1197 = vmul.f32 %v621, %v1196
        %v1198 = vrcp.pop %v1097
        %v1199 = vmul.f32 %v623, %v1198
        %v1200 = vrcp.pop %v1098
        %v1201 = vmul.f32 %v625, %v1200
        %v1202 = vrcp.pop %v1099
        %v1203 = vmul.f32 %v627, %v1202
        %v1204 = vrcp.pop %v1100
        %v1205 = vmul.f32 %v629, %v1204
        %v1206 = vrcp.pop %v1101
        %v1207 = vmul.f32 %v631, %v1206
        %v1208 = vrcp.pop %v1102
        %v1209 = vmul.f32 %v633, %v1208
        %v1210 = vrcp.pop %v1103
        %v1211 = vmul.f32 %v635, %v1210
        %v1212 = vrcp.pop %v1104
        %v1213 = vmul.f32 %v637, %v1212
        %v1214 = vrcp.pop %v1105
        %v1215 = vmul.f32 %v639, %v1214
        %v1216 = vrcp.pop %v1106
        %v1217 = vmul.f32 %v641, %v1216
        %v1218 = vrcp.pop %v1107
        %v1219 = vmul.f32 %v643, %v1218
        %v1220 = vrcp.pop %v1108
        %v1221 = vmul.f32 %v645, %v1220
        %v1222 = vrcp.pop %v1109
        %v1223 = vmul.f32 %v647, %v1222
        %v1224 = vrcp.pop %v1110
        %v1225 = vmul.f32 %v649, %v1224
        %v1226 = vrcp.pop %v1111
        %v1227 = vmul.f32 %v651, %v1226
        %v1228 = vrcp.pop %v1112
        %v1229 = vmul.f32 %v653, %v1228
        %v1230 = vrcp.pop %v1113
        %v1231 = vmul.f32 %v655, %v1230
        %v1232 = vrcp.pop %v1114
        %v1233 = vmul.f32 %v657, %v1232
        %v1234 = vrcp.pop %v1115
        %v1235 = vmul.f32 %v659, %v1234
        %v1236 = vrcp.pop %v1116
        %v1237 = vmul.f32 %v661, %v1236
        %v1238 = vrcp.pop %v1117
        %v1239 = vmul.f32 %v663, %v1238
        %v1240 = vrcp.pop %v1118
        %v1241 = vmul.f32 %v665, %v1240
        %v1242 = vrcp.pop %v1119
        %v1243 = vmul.f32 %v667, %v1242
        %v1244 = vrcp.pop %v1120
        %v1245 = vmul.f32 %v669, %v1244
        %v1246 = vrcp.pop %v1121
        %v1247 = vmul.f32 %v671, %v1246
        %v1248 = vrcp.pop %v1122
        %v1249 = vmul.f32 %v673, %v1248
        %v1250 = vrcp.pop %v1123
        %v1251 = vmul.f32 %v675, %v1250
        %v1252 = vrsqrt.pop %v1125
        %v1253 = vmul.f32 %v1125, %v1252
        %vm1254 = vcmp.eq.f32.partialorder %v1125, inf
        %v1255 = vsel %vm1254, %v1125, %v1253
        %vm1256 = vcmp.eq.f32.partialorder %v1125, 0.0
        %v1257 = vand.u32 %v1125, 2147483648
        %v1258 = vsel %vm1256, %v1257, %v1255
        %v1259 = vrsqrt.pop %v1127
        %v1260 = vmul.f32 %v1127, %v1259
        %vm1261 = vcmp.eq.f32.partialorder %v1127, inf
        %v1262 = vsel %vm1261, %v1127, %v1260
        %vm1263 = vcmp.eq.f32.partialorder %v1127, 0.0
        %v1264 = vand.u32 %v1127, 2147483648
        %v1265 = vsel %vm1263, %v1264, %v1262
        %v1266 = vrsqrt.pop %v1129
        %v1267 = vmul.f32 %v1129, %v1266
        %vm1268 = vcmp.eq.f32.partialorder %v1129, inf
        %v1269 = vsel %vm1268, %v1129, %v1267
        %vm1270 = vcmp.eq.f32.partialorder %v1129, 0.0
        %v1271 = vand.u32 %v1129, 2147483648
        %v1272 = vsel %vm1270, %v1271, %v1269
        %v1273 = vrsqrt.pop %v1131
        %v1274 = vmul.f32 %v1131, %v1273
        %vm1275 = vcmp.eq.f32.partialorder %v1131, inf
        %v1276 = vsel %vm1275, %v1131, %v1274
        %vm1277 = vcmp.eq.f32.partialorder %v1131, 0.0
        %v1278 = vand.u32 %v1131, 2147483648
        %v1279 = vsel %vm1277, %v1278, %v1276
        %v1280 = vrsqrt.pop %v1133
        %v1281 = vmul.f32 %v1133, %v1280
        %vm1282 = vcmp.eq.f32.partialorder %v1133, inf
        %v1283 = vsel %vm1282, %v1133, %v1281
        %vm1284 = vcmp.eq.f32.partialorder %v1133, 0.0
        %v1285 = vand.u32 %v1133, 2147483648
        %v1286 = vsel %vm1284, %v1285, %v1283
        %v1287 = vrsqrt.pop %v1135
        %v1288 = vmul.f32 %v1135, %v1287
        %vm1289 = vcmp.eq.f32.partialorder %v1135, inf
        %v1290 = vsel %vm1289, %v1135, %v1288
        %vm1291 = vcmp.eq.f32.partialorder %v1135, 0.0
        %v1292 = vand.u32 %v1135, 2147483648
        %v1293 = vsel %vm1291, %v1292, %v1290
        %v1294 = vrsqrt.pop %v1137
        %v1295 = vmul.f32 %v1137, %v1294
        %vm1296 = vcmp.eq.f32.partialorder %v1137, inf
        %v1297 = vsel %vm1296, %v1137, %v1295
        %vm1298 = vcmp.eq.f32.partialorder %v1137, 0.0
        %v1299 = vand.u32 %v1137, 2147483648
        %v1300 = vsel %vm1298, %v1299, %v1297
        %v1301 = vrsqrt.pop %v1139
        %v1302 = vmul.f32 %v1139, %v1301
        %vm1303 = vcmp.eq.f32.partialorder %v1139, inf
        %v1304 = vsel %vm1303, %v1139, %v1302
        %vm1305 = vcmp.eq.f32.partialorder %v1139, 0.0
        %v1306 = vand.u32 %v1139, 2147483648
        %v1307 = vsel %vm1305, %v1306, %v1304
        %v1308 = vrsqrt.pop %v1141
        %v1309 = vmul.f32 %v1141, %v1308
        %vm1310 = vcmp.eq.f32.partialorder %v1141, inf
        %v1311 = vsel %vm1310, %v1141, %v1309
        %vm1312 = vcmp.eq.f32.partialorder %v1141, 0.0
        %v1313 = vand.u32 %v1141, 2147483648
        %v1314 = vsel %vm1312, %v1313, %v1311
        %v1315 = vrsqrt.pop %v1143
        %v1316 = vmul.f32 %v1143, %v1315
        %vm1317 = vcmp.eq.f32.partialorder %v1143, inf
        %v1318 = vsel %vm1317, %v1143, %v1316
        %vm1319 = vcmp.eq.f32.partialorder %v1143, 0.0
        %v1320 = vand.u32 %v1143, 2147483648
        %v1321 = vsel %vm1319, %v1320, %v1318
        %v1322 = vrsqrt.pop %v1145
        %v1323 = vmul.f32 %v1145, %v1322
        %vm1324 = vcmp.eq.f32.partialorder %v1145, inf
        %v1325 = vsel %vm1324, %v1145, %v1323
        %vm1326 = vcmp.eq.f32.partialorder %v1145, 0.0
        %v1327 = vand.u32 %v1145, 2147483648
        %v1328 = vsel %vm1326, %v1327, %v1325
        %v1329 = vrsqrt.pop %v1147
        %v1330 = vmul.f32 %v1147, %v1329
        %vm1331 = vcmp.eq.f32.partialorder %v1147, inf
        %v1332 = vsel %vm1331, %v1147, %v1330
        %vm1333 = vcmp.eq.f32.partialorder %v1147, 0.0
        %v1334 = vand.u32 %v1147, 2147483648
        %v1335 = vsel %vm1333, %v1334, %v1332
        %v1336 = vrsqrt.pop %v1149
        %v1337 = vmul.f32 %v1149, %v1336
        %vm1338 = vcmp.eq.f32.partialorder %v1149, inf
        %v1339 = vsel %vm1338, %v1149, %v1337
        %vm1340 = vcmp.eq.f32.partialorder %v1149, 0.0
        %v1341 = vand.u32 %v1149, 2147483648
        %v1342 = vsel %vm1340, %v1341, %v1339
        %v1343 = vrsqrt.pop %v1151
        %v1344 = vmul.f32 %v1151, %v1343
        %vm1345 = vcmp.eq.f32.partialorder %v1151, inf
        %v1346 = vsel %vm1345, %v1151, %v1344
        %vm1347 = vcmp.eq.f32.partialorder %v1151, 0.0
        %v1348 = vand.u32 %v1151, 2147483648
        %v1349 = vsel %vm1347, %v1348, %v1346
        %v1350 = vrsqrt.pop %v1153
        %v1351 = vmul.f32 %v1153, %v1350
        %vm1352 = vcmp.eq.f32.partialorder %v1153, inf
        %v1353 = vsel %vm1352, %v1153, %v1351
        %vm1354 = vcmp.eq.f32.partialorder %v1153, 0.0
        %v1355 = vand.u32 %v1153, 2147483648
        %v1356 = vsel %vm1354, %v1355, %v1353
        %v1357 = vrsqrt.pop %v1155
        %v1358 = vmul.f32 %v1155, %v1357
        %vm1359 = vcmp.eq.f32.partialorder %v1155, inf
        %v1360 = vsel %vm1359, %v1155, %v1358
        %vm1361 = vcmp.eq.f32.partialorder %v1155, 0.0
        %v1362 = vand.u32 %v1155, 2147483648
        %v1363 = vsel %vm1361, %v1362, %v1360
        %v1364 = vrsqrt.pop %v1157
        %v1365 = vmul.f32 %v1157, %v1364
        %vm1366 = vcmp.eq.f32.partialorder %v1157, inf
        %v1367 = vsel %vm1366, %v1157, %v1365
        %vm1368 = vcmp.eq.f32.partialorder %v1157, 0.0
        %v1369 = vand.u32 %v1157, 2147483648
        %v1370 = vsel %vm1368, %v1369, %v1367
        %v1371 = vrsqrt.pop %v1159
        %v1372 = vmul.f32 %v1159, %v1371
        %vm1373 = vcmp.eq.f32.partialorder %v1159, inf
        %v1374 = vsel %vm1373, %v1159, %v1372
        %vm1375 = vcmp.eq.f32.partialorder %v1159, 0.0
        %v1376 = vand.u32 %v1159, 2147483648
        %v1377 = vsel %vm1375, %v1376, %v1374
        %v1378 = vrsqrt.pop %v1161
        %v1379 = vmul.f32 %v1161, %v1378
        %vm1380 = vcmp.eq.f32.partialorder %v1161, inf
        %v1381 = vsel %vm1380, %v1161, %v1379
        %vm1382 = vcmp.eq.f32.partialorder %v1161, 0.0
        %v1383 = vand.u32 %v1161, 2147483648
        %v1384 = vsel %vm1382, %v1383, %v1381
        %v1385 = vrsqrt.pop %v1163
        %v1386 = vmul.f32 %v1163, %v1385
        %vm1387 = vcmp.eq.f32.partialorder %v1163, inf
        %v1388 = vsel %vm1387, %v1163, %v1386
        %vm1389 = vcmp.eq.f32.partialorder %v1163, 0.0
        %v1390 = vand.u32 %v1163, 2147483648
        %v1391 = vsel %vm1389, %v1390, %v1388
        %v1392 = vrsqrt.pop %v1165
        %v1393 = vmul.f32 %v1165, %v1392
        %vm1394 = vcmp.eq.f32.partialorder %v1165, inf
        %v1395 = vsel %vm1394, %v1165, %v1393
        %vm1396 = vcmp.eq.f32.partialorder %v1165, 0.0
        %v1397 = vand.u32 %v1165, 2147483648
        %v1398 = vsel %vm1396, %v1397, %v1395
        %v1399 = vrsqrt.pop %v1167
        %v1400 = vmul.f32 %v1167, %v1399
        %vm1401 = vcmp.eq.f32.partialorder %v1167, inf
        %v1402 = vsel %vm1401, %v1167, %v1400
        %vm1403 = vcmp.eq.f32.partialorder %v1167, 0.0
        %v1404 = vand.u32 %v1167, 2147483648
        %v1405 = vsel %vm1403, %v1404, %v1402
        %v1406 = vrsqrt.pop %v1169
        %v1407 = vmul.f32 %v1169, %v1406
        %vm1408 = vcmp.eq.f32.partialorder %v1169, inf
        %v1409 = vsel %vm1408, %v1169, %v1407
        %vm1410 = vcmp.eq.f32.partialorder %v1169, 0.0
        %v1411 = vand.u32 %v1169, 2147483648
        %v1412 = vsel %vm1410, %v1411, %v1409
        %v1413 = vrsqrt.pop %v1171
        %v1414 = vmul.f32 %v1171, %v1413
        %vm1415 = vcmp.eq.f32.partialorder %v1171, inf
        %v1416 = vsel %vm1415, %v1171, %v1414
        %vm1417 = vcmp.eq.f32.partialorder %v1171, 0.0
        %v1418 = vand.u32 %v1171, 2147483648
        %v1419 = vsel %vm1417, %v1418, %v1416
        %v1420 = vrsqrt.pop %v1173
        %v1421 = vmul.f32 %v1173, %v1420
        %vm1422 = vcmp.eq.f32.partialorder %v1173, inf
        %v1423 = vsel %vm1422, %v1173, %v1421
        %vm1424 = vcmp.eq.f32.partialorder %v1173, 0.0
        %v1425 = vand.u32 %v1173, 2147483648
        %v1426 = vsel %vm1424, %v1425, %v1423
        %v1427 = vrsqrt.pop %v1175
        %v1428 = vmul.f32 %v1175, %v1427
        %vm1429 = vcmp.eq.f32.partialorder %v1175, inf
        %v1430 = vsel %vm1429, %v1175, %v1428
        %vm1431 = vcmp.eq.f32.partialorder %v1175, 0.0
        %v1432 = vand.u32 %v1175, 2147483648
        %v1433 = vsel %vm1431, %v1432, %v1430
        %v1434 = vrsqrt.pop %v1177
        %v1435 = vmul.f32 %v1177, %v1434
        %vm1436 = vcmp.eq.f32.partialorder %v1177, inf
        %v1437 = vsel %vm1436, %v1177, %v1435
        %vm1438 = vcmp.eq.f32.partialorder %v1177, 0.0
        %v1439 = vand.u32 %v1177, 2147483648
        %v1440 = vsel %vm1438, %v1439, %v1437
        %v1441 = vrsqrt.pop %v1179
        %v1442 = vmul.f32 %v1179, %v1441
        %vm1443 = vcmp.eq.f32.partialorder %v1179, inf
        %v1444 = vsel %vm1443, %v1179, %v1442
        %vm1445 = vcmp.eq.f32.partialorder %v1179, 0.0
        %v1446 = vand.u32 %v1179, 2147483648
        %v1447 = vsel %vm1445, %v1446, %v1444
        %v1448 = vrsqrt.pop %v1181
        %v1449 = vmul.f32 %v1181, %v1448
        %vm1450 = vcmp.eq.f32.partialorder %v1181, inf
        %v1451 = vsel %vm1450, %v1181, %v1449
        %vm1452 = vcmp.eq.f32.partialorder %v1181, 0.0
        %v1453 = vand.u32 %v1181, 2147483648
        %v1454 = vsel %vm1452, %v1453, %v1451
        %v1455 = vrsqrt.pop %v1183
        %v1456 = vmul.f32 %v1183, %v1455
        %vm1457 = vcmp.eq.f32.partialorder %v1183, inf
        %v1458 = vsel %vm1457, %v1183, %v1456
        %vm1459 = vcmp.eq.f32.partialorder %v1183, 0.0
        %v1460 = vand.u32 %v1183, 2147483648
        %v1461 = vsel %vm1459, %v1460, %v1458
        %v1462 = vrsqrt.pop %v1185
        %v1463 = vmul.f32 %v1185, %v1462
        %vm1464 = vcmp.eq.f32.partialorder %v1185, inf
        %v1465 = vsel %vm1464, %v1185, %v1463
        %vm1466 = vcmp.eq.f32.partialorder %v1185, 0.0
        %v1467 = vand.u32 %v1185, 2147483648
        %v1468 = vsel %vm1466, %v1467, %v1465
        %v1469 = vrsqrt.pop %v1187
        %v1470 = vmul.f32 %v1187, %v1469
        %vm1471 = vcmp.eq.f32.partialorder %v1187, inf
        %v1472 = vsel %vm1471, %v1187, %v1470
        %vm1473 = vcmp.eq.f32.partialorder %v1187, 0.0
        %v1474 = vand.u32 %v1187, 2147483648
        %v1475 = vsel %vm1473, %v1474, %v1472
        %v1476 = vrsqrt.pop %v1189
        %v1477 = vmul.f32 %v1189, %v1476
        %vm1478 = vcmp.eq.f32.partialorder %v1189, inf
        %v1479 = vsel %vm1478, %v1189, %v1477
        %vm1480 = vcmp.eq.f32.partialorder %v1189, 0.0
        %v1481 = vand.u32 %v1189, 2147483648
        %v1482 = vsel %vm1480, %v1481, %v1479
        %v1483 = vrsqrt.pop %v1191
        %v1484 = vmul.f32 %v1191, %v1483
        %vm1485 = vcmp.eq.f32.partialorder %v1191, inf
        %v1486 = vsel %vm1485, %v1191, %v1484
        %vm1487 = vcmp.eq.f32.partialorder %v1191, 0.0
        %v1488 = vand.u32 %v1191, 2147483648
        %v1489 = vsel %vm1487, %v1488, %v1486
        %v1490 = vrsqrt.pop %v1193
        %v1491 = vmul.f32 %v1193, %v1490
        %vm1492 = vcmp.eq.f32.partialorder %v1193, inf
        %v1493 = vsel %vm1492, %v1193, %v1491
        %vm1494 = vcmp.eq.f32.partialorder %v1193, 0.0
        %v1495 = vand.u32 %v1193, 2147483648
        %v1496 = vsel %vm1494, %v1495, %v1493
        %v1497 = vrsqrt.pop %v1195
        %v1498 = vmul.f32 %v1195, %v1497
        %vm1499 = vcmp.eq.f32.partialorder %v1195, inf
        %v1500 = vsel %vm1499, %v1195, %v1498
        %vm1501 = vcmp.eq.f32.partialorder %v1195, 0.0
        %v1502 = vand.u32 %v1195, 2147483648
        %v1503 = vsel %vm1501, %v1502, %v1500
        %v1504 = vrsqrt.pop %v1197
        %v1505 = vmul.f32 %v1197, %v1504
        %vm1506 = vcmp.eq.f32.partialorder %v1197, inf
        %v1507 = vsel %vm1506, %v1197, %v1505
        %vm1508 = vcmp.eq.f32.partialorder %v1197, 0.0
        %v1509 = vand.u32 %v1197, 2147483648
        %v1510 = vsel %vm1508, %v1509, %v1507
        %v1511 = vrsqrt.pop %v1199
        %v1512 = vmul.f32 %v1199, %v1511
        %vm1513 = vcmp.eq.f32.partialorder %v1199, inf
        %v1514 = vsel %vm1513, %v1199, %v1512
        %vm1515 = vcmp.eq.f32.partialorder %v1199, 0.0
        %v1516 = vand.u32 %v1199, 2147483648
        %v1517 = vsel %vm1515, %v1516, %v1514
        %v1518 = vrsqrt.pop %v1201
        %v1519 = vmul.f32 %v1201, %v1518
        %vm1520 = vcmp.eq.f32.partialorder %v1201, inf
        %v1521 = vsel %vm1520, %v1201, %v1519
        %vm1522 = vcmp.eq.f32.partialorder %v1201, 0.0
        %v1523 = vand.u32 %v1201, 2147483648
        %v1524 = vsel %vm1522, %v1523, %v1521
        %v1525 = vrsqrt.pop %v1203
        %v1526 = vmul.f32 %v1203, %v1525
        %vm1527 = vcmp.eq.f32.partialorder %v1203, inf
        %v1528 = vsel %vm1527, %v1203, %v1526
        %vm1529 = vcmp.eq.f32.partialorder %v1203, 0.0
        %v1530 = vand.u32 %v1203, 2147483648
        %v1531 = vsel %vm1529, %v1530, %v1528
        %v1532 = vrsqrt.pop %v1205
        %v1533 = vmul.f32 %v1205, %v1532
        %vm1534 = vcmp.eq.f32.partialorder %v1205, inf
        %v1535 = vsel %vm1534, %v1205, %v1533
        %vm1536 = vcmp.eq.f32.partialorder %v1205, 0.0
        %v1537 = vand.u32 %v1205, 2147483648
        %v1538 = vsel %vm1536, %v1537, %v1535
        %v1539 = vrsqrt.pop %v1207
        %v1540 = vmul.f32 %v1207, %v1539
        %vm1541 = vcmp.eq.f32.partialorder %v1207, inf
        %v1542 = vsel %vm1541, %v1207, %v1540
        %vm1543 = vcmp.eq.f32.partialorder %v1207, 0.0
        %v1544 = vand.u32 %v1207, 2147483648
        %v1545 = vsel %vm1543, %v1544, %v1542
        %v1546 = vrsqrt.pop %v1209
        %v1547 = vmul.f32 %v1209, %v1546
        %vm1548 = vcmp.eq.f32.partialorder %v1209, inf
        %v1549 = vsel %vm1548, %v1209, %v1547
        %vm1550 = vcmp.eq.f32.partialorder %v1209, 0.0
        %v1551 = vand.u32 %v1209, 2147483648
        %v1552 = vsel %vm1550, %v1551, %v1549
        %v1553 = vrsqrt.pop %v1211
        %v1554 = vmul.f32 %v1211, %v1553
        %vm1555 = vcmp.eq.f32.partialorder %v1211, inf
        %v1556 = vsel %vm1555, %v1211, %v1554
        %vm1557 = vcmp.eq.f32.partialorder %v1211, 0.0
        %v1558 = vand.u32 %v1211, 2147483648
        %v1559 = vsel %vm1557, %v1558, %v1556
        %v1560 = vrsqrt.pop %v1213
        %v1561 = vmul.f32 %v1213, %v1560
        %vm1562 = vcmp.eq.f32.partialorder %v1213, inf
        %v1563 = vsel %vm1562, %v1213, %v1561
        %vm1564 = vcmp.eq.f32.partialorder %v1213, 0.0
        %v1565 = vand.u32 %v1213, 2147483648
        %v1566 = vsel %vm1564, %v1565, %v1563
        %v1567 = vrsqrt.pop %v1215
        %v1568 = vmul.f32 %v1215, %v1567
        %vm1569 = vcmp.eq.f32.partialorder %v1215, inf
        %v1570 = vsel %vm1569, %v1215, %v1568
        %vm1571 = vcmp.eq.f32.partialorder %v1215, 0.0
        %v1572 = vand.u32 %v1215, 2147483648
        %v1573 = vsel %vm1571, %v1572, %v1570
        %v1574 = vrsqrt.pop %v1217
        %v1575 = vmul.f32 %v1217, %v1574
        %vm1576 = vcmp.eq.f32.partialorder %v1217, inf
        %v1577 = vsel %vm1576, %v1217, %v1575
        %vm1578 = vcmp.eq.f32.partialorder %v1217, 0.0
        %v1579 = vand.u32 %v1217, 2147483648
        %v1580 = vsel %vm1578, %v1579, %v1577
        %v1581 = vrsqrt.pop %v1219
        %v1582 = vmul.f32 %v1219, %v1581
        %vm1583 = vcmp.eq.f32.partialorder %v1219, inf
        %v1584 = vsel %vm1583, %v1219, %v1582
        %vm1585 = vcmp.eq.f32.partialorder %v1219, 0.0
        %v1586 = vand.u32 %v1219, 2147483648
        %v1587 = vsel %vm1585, %v1586, %v1584
        %v1588 = vrsqrt.pop %v1221
        %v1589 = vmul.f32 %v1221, %v1588
        %vm1590 = vcmp.eq.f32.partialorder %v1221, inf
        %v1591 = vsel %vm1590, %v1221, %v1589
        %vm1592 = vcmp.eq.f32.partialorder %v1221, 0.0
        %v1593 = vand.u32 %v1221, 2147483648
        %v1594 = vsel %vm1592, %v1593, %v1591
        %v1595 = vrsqrt.pop %v1223
        %v1596 = vmul.f32 %v1223, %v1595
        %vm1597 = vcmp.eq.f32.partialorder %v1223, inf
        %v1598 = vsel %vm1597, %v1223, %v1596
        %vm1599 = vcmp.eq.f32.partialorder %v1223, 0.0
        %v1600 = vand.u32 %v1223, 2147483648
        %v1601 = vsel %vm1599, %v1600, %v1598
        %v1602 = vrsqrt.pop %v1225
        %v1603 = vmul.f32 %v1225, %v1602
        %vm1604 = vcmp.eq.f32.partialorder %v1225, inf
        %v1605 = vsel %vm1604, %v1225, %v1603
        %vm1606 = vcmp.eq.f32.partialorder %v1225, 0.0
        %v1607 = vand.u32 %v1225, 2147483648
        %v1608 = vsel %vm1606, %v1607, %v1605
        %v1609 = vrsqrt.pop %v1227
        %v1610 = vmul.f32 %v1227, %v1609
        %vm1611 = vcmp.eq.f32.partialorder %v1227, inf
        %v1612 = vsel %vm1611, %v1227, %v1610
        %vm1613 = vcmp.eq.f32.partialorder %v1227, 0.0
        %v1614 = vand.u32 %v1227, 2147483648
        %v1615 = vsel %vm1613, %v1614, %v1612
        %v1616 = vrsqrt.pop %v1229
        %v1617 = vmul.f32 %v1229, %v1616
        %vm1618 = vcmp.eq.f32.partialorder %v1229, inf
        %v1619 = vsel %vm1618, %v1229, %v1617
        %vm1620 = vcmp.eq.f32.partialorder %v1229, 0.0
        %v1621 = vand.u32 %v1229, 2147483648
        %v1622 = vsel %vm1620, %v1621, %v1619
        %v1623 = vrsqrt.pop %v1231
        %v1624 = vmul.f32 %v1231, %v1623
        %vm1625 = vcmp.eq.f32.partialorder %v1231, inf
        %v1626 = vsel %vm1625, %v1231, %v1624
        %vm1627 = vcmp.eq.f32.partialorder %v1231, 0.0
        %v1628 = vand.u32 %v1231, 2147483648
        %v1629 = vsel %vm1627, %v1628, %v1626
        %v1630 = vrsqrt.pop %v1233
        %v1631 = vmul.f32 %v1233, %v1630
        %vm1632 = vcmp.eq.f32.partialorder %v1233, inf
        %v1633 = vsel %vm1632, %v1233, %v1631
        %vm1634 = vcmp.eq.f32.partialorder %v1233, 0.0
        %v1635 = vand.u32 %v1233, 2147483648
        %v1636 = vsel %vm1634, %v1635, %v1633
        %v1637 = vrsqrt.pop %v1235
        %v1638 = vmul.f32 %v1235, %v1637
        %vm1639 = vcmp.eq.f32.partialorder %v1235, inf
        %v1640 = vsel %vm1639, %v1235, %v1638
        %vm1641 = vcmp.eq.f32.partialorder %v1235, 0.0
        %v1642 = vand.u32 %v1235, 2147483648
        %v1643 = vsel %vm1641, %v1642, %v1640
        %v1644 = vrsqrt.pop %v1237
        %v1645 = vmul.f32 %v1237, %v1644
        %vm1646 = vcmp.eq.f32.partialorder %v1237, inf
        %v1647 = vsel %vm1646, %v1237, %v1645
        %vm1648 = vcmp.eq.f32.partialorder %v1237, 0.0
        %v1649 = vand.u32 %v1237, 2147483648
        %v1650 = vsel %vm1648, %v1649, %v1647
        %v1651 = vrsqrt.pop %v1239
        %v1652 = vmul.f32 %v1239, %v1651
        %vm1653 = vcmp.eq.f32.partialorder %v1239, inf
        %v1654 = vsel %vm1653, %v1239, %v1652
        %vm1655 = vcmp.eq.f32.partialorder %v1239, 0.0
        %v1656 = vand.u32 %v1239, 2147483648
        %v1657 = vsel %vm1655, %v1656, %v1654
        %v1658 = vrsqrt.pop %v1241
        %v1659 = vmul.f32 %v1241, %v1658
        %vm1660 = vcmp.eq.f32.partialorder %v1241, inf
        %v1661 = vsel %vm1660, %v1241, %v1659
        %vm1662 = vcmp.eq.f32.partialorder %v1241, 0.0
        %v1663 = vand.u32 %v1241, 2147483648
        %v1664 = vsel %vm1662, %v1663, %v1661
        %v1665 = vrsqrt.pop %v1243
        %v1666 = vmul.f32 %v1243, %v1665
        %vm1667 = vcmp.eq.f32.partialorder %v1243, inf
        %v1668 = vsel %vm1667, %v1243, %v1666
        %vm1669 = vcmp.eq.f32.partialorder %v1243, 0.0
        %v1670 = vand.u32 %v1243, 2147483648
        %v1671 = vsel %vm1669, %v1670, %v1668
        %v1672 = vrsqrt.pop %v1245
        %v1673 = vmul.f32 %v1245, %v1672
        %vm1674 = vcmp.eq.f32.partialorder %v1245, inf
        %v1675 = vsel %vm1674, %v1245, %v1673
        %vm1676 = vcmp.eq.f32.partialorder %v1245, 0.0
        %v1677 = vand.u32 %v1245, 2147483648
        %v1678 = vsel %vm1676, %v1677, %v1675
        %v1679 = vrsqrt.pop %v1247
        %v1680 = vmul.f32 %v1247, %v1679
        %vm1681 = vcmp.eq.f32.partialorder %v1247, inf
        %v1682 = vsel %vm1681, %v1247, %v1680
        %vm1683 = vcmp.eq.f32.partialorder %v1247, 0.0
        %v1684 = vand.u32 %v1247, 2147483648
        %v1685 = vsel %vm1683, %v1684, %v1682
        %v1686 = vrsqrt.pop %v1249
        %v1687 = vmul.f32 %v1249, %v1686
        %vm1688 = vcmp.eq.f32.partialorder %v1249, inf
        %v1689 = vsel %vm1688, %v1249, %v1687
        %vm1690 = vcmp.eq.f32.partialorder %v1249, 0.0
        %v1691 = vand.u32 %v1249, 2147483648
        %v1692 = vsel %vm1690, %v1691, %v1689
        %v1693 = vrsqrt.pop %v1251
        %v1694 = vmul.f32 %v1251, %v1693
        %vm1695 = vcmp.eq.f32.partialorder %v1251, inf
        %v1696 = vsel %vm1695, %v1251, %v1694
        %vm1697 = vcmp.eq.f32.partialorder %v1251, 0.0
        %v1698 = vand.u32 %v1251, 2147483648
        %v1699 = vsel %vm1697, %v1698, %v1696
        %1701 = vset.pattern.permute.xlu0 0
        %1702 = vperm.xlu0 %1701, %v1258
        %v1703 = vpop.permute.xlu0 %1702
        %1706 = vset.pattern.permute.xlu0 0
        %1707 = vperm.xlu0 %1706, %v1265
        %v1708 = vpop.permute.xlu0 %1707
        %1711 = vset.pattern.permute.xlu0 0
        %1712 = vperm.xlu0 %1711, %v1272
        %v1713 = vpop.permute.xlu0 %1712
        %1716 = vset.pattern.permute.xlu0 0
        %1717 = vperm.xlu0 %1716, %v1279
        %v1718 = vpop.permute.xlu0 %1717
        %1721 = vset.pattern.permute.xlu0 0
        %1722 = vperm.xlu0 %1721, %v1286
        %v1723 = vpop.permute.xlu0 %1722
        %1726 = vset.pattern.permute.xlu0 0
        %1727 = vperm.xlu0 %1726, %v1293
        %v1728 = vpop.permute.xlu0 %1727
        %1731 = vset.pattern.permute.xlu0 0
        %1732 = vperm.xlu0 %1731, %v1300
        %v1733 = vpop.permute.xlu0 %1732
        %1736 = vset.pattern.permute.xlu0 0
        %1737 = vperm.xlu0 %1736, %v1307
        %v1738 = vpop.permute.xlu0 %1737
        %1741 = vset.pattern.permute.xlu0 0
        %1742 = vperm.xlu0 %1741, %v1314
        %v1743 = vpop.permute.xlu0 %1742
        %1746 = vset.pattern.permute.xlu0 0
        %1747 = vperm.xlu0 %1746, %v1321
        %v1748 = vpop.permute.xlu0 %1747
        %1751 = vset.pattern.permute.xlu0 0
        %1752 = vperm.xlu0 %1751, %v1328
        %v1753 = vpop.permute.xlu0 %1752
        %1756 = vset.pattern.permute.xlu0 0
        %1757 = vperm.xlu0 %1756, %v1335
        %v1758 = vpop.permute.xlu0 %1757
        %1761 = vset.pattern.permute.xlu0 0
        %1762 = vperm.xlu0 %1761, %v1342
        %v1763 = vpop.permute.xlu0 %1762
        %1766 = vset.pattern.permute.xlu0 0
        %1767 = vperm.xlu0 %1766, %v1349
        %v1768 = vpop.permute.xlu0 %1767
        %1771 = vset.pattern.permute.xlu0 0
        %1772 = vperm.xlu0 %1771, %v1356
        %v1773 = vpop.permute.xlu0 %1772
        %1776 = vset.pattern.permute.xlu0 0
        %1777 = vperm.xlu0 %1776, %v1363
        %v1778 = vpop.permute.xlu0 %1777
        %1781 = vset.pattern.permute.xlu0 0
        %1782 = vperm.xlu0 %1781, %v1370
        %v1783 = vpop.permute.xlu0 %1782
        %1786 = vset.pattern.permute.xlu0 0
        %1787 = vperm.xlu0 %1786, %v1377
        %v1788 = vpop.permute.xlu0 %1787
        %1791 = vset.pattern.permute.xlu0 0
        %1792 = vperm.xlu0 %1791, %v1384
        %v1793 = vpop.permute.xlu0 %1792
        %1796 = vset.pattern.permute.xlu0 0
        %1797 = vperm.xlu0 %1796, %v1391
        %v1798 = vpop.permute.xlu0 %1797
        %1801 = vset.pattern.permute.xlu0 0
        %1802 = vperm.xlu0 %1801, %v1398
        %v1803 = vpop.permute.xlu0 %1802
        %1806 = vset.pattern.permute.xlu0 0
        %1807 = vperm.xlu0 %1806, %v1405
        %v1808 = vpop.permute.xlu0 %1807
        %1811 = vset.pattern.permute.xlu0 0
        %1812 = vperm.xlu0 %1811, %v1412
        %v1813 = vpop.permute.xlu0 %1812
        %1816 = vset.pattern.permute.xlu0 0
        %1817 = vperm.xlu0 %1816, %v1419
        %v1818 = vpop.permute.xlu0 %1817
        %1821 = vset.pattern.permute.xlu0 0
        %1822 = vperm.xlu0 %1821, %v1426
        %v1823 = vpop.permute.xlu0 %1822
        %1826 = vset.pattern.permute.xlu0 0
        %1827 = vperm.xlu0 %1826, %v1433
        %v1828 = vpop.permute.xlu0 %1827
        %1831 = vset.pattern.permute.xlu0 0
        %1832 = vperm.xlu0 %1831, %v1440
        %v1833 = vpop.permute.xlu0 %1832
        %1836 = vset.pattern.permute.xlu0 0
        %1837 = vperm.xlu0 %1836, %v1447
        %v1838 = vpop.permute.xlu0 %1837
        %1841 = vset.pattern.permute.xlu0 0
        %1842 = vperm.xlu0 %1841, %v1454
        %v1843 = vpop.permute.xlu0 %1842
        %1846 = vset.pattern.permute.xlu0 0
        %1847 = vperm.xlu0 %1846, %v1461
        %v1848 = vpop.permute.xlu0 %1847
        %1851 = vset.pattern.permute.xlu0 0
        %1852 = vperm.xlu0 %1851, %v1468
        %v1853 = vpop.permute.xlu0 %1852
        %1856 = vset.pattern.permute.xlu0 0
        %1857 = vperm.xlu0 %1856, %v1475
        %v1858 = vpop.permute.xlu0 %1857
        %1861 = vset.pattern.permute.xlu0 0
        %1862 = vperm.xlu0 %1861, %v1482
        %v1863 = vpop.permute.xlu0 %1862
        %1866 = vset.pattern.permute.xlu0 0
        %1867 = vperm.xlu0 %1866, %v1489
        %v1868 = vpop.permute.xlu0 %1867
        %1871 = vset.pattern.permute.xlu0 0
        %1872 = vperm.xlu0 %1871, %v1496
        %v1873 = vpop.permute.xlu0 %1872
        %1876 = vset.pattern.permute.xlu0 0
        %1877 = vperm.xlu0 %1876, %v1503
        %v1878 = vpop.permute.xlu0 %1877
        %1881 = vset.pattern.permute.xlu0 0
        %1882 = vperm.xlu0 %1881, %v1510
        %v1883 = vpop.permute.xlu0 %1882
        %1886 = vset.pattern.permute.xlu0 0
        %1887 = vperm.xlu0 %1886, %v1517
        %v1888 = vpop.permute.xlu0 %1887
        %1891 = vset.pattern.permute.xlu0 0
        %1892 = vperm.xlu0 %1891, %v1524
        %v1893 = vpop.permute.xlu0 %1892
        %1896 = vset.pattern.permute.xlu0 0
        %1897 = vperm.xlu0 %1896, %v1531
        %v1898 = vpop.permute.xlu0 %1897
        %1901 = vset.pattern.permute.xlu0 0
        %1902 = vperm.xlu0 %1901, %v1538
        %v1903 = vpop.permute.xlu0 %1902
        %1906 = vset.pattern.permute.xlu0 0
        %1907 = vperm.xlu0 %1906, %v1545
        %v1908 = vpop.permute.xlu0 %1907
        %1911 = vset.pattern.permute.xlu0 0
        %1912 = vperm.xlu0 %1911, %v1552
        %v1913 = vpop.permute.xlu0 %1912
        %1916 = vset.pattern.permute.xlu0 0
        %1917 = vperm.xlu0 %1916, %v1559
        %v1918 = vpop.permute.xlu0 %1917
        %1921 = vset.pattern.permute.xlu0 0
        %1922 = vperm.xlu0 %1921, %v1566
        %v1923 = vpop.permute.xlu0 %1922
        %1926 = vset.pattern.permute.xlu0 0
        %1927 = vperm.xlu0 %1926, %v1573
        %v1928 = vpop.permute.xlu0 %1927
        %1931 = vset.pattern.permute.xlu0 0
        %1932 = vperm.xlu0 %1931, %v1580
        %v1933 = vpop.permute.xlu0 %1932
        %1936 = vset.pattern.permute.xlu0 0
        %1937 = vperm.xlu0 %1936, %v1587
        %v1938 = vpop.permute.xlu0 %1937
        %1941 = vset.pattern.permute.xlu0 0
        %1942 = vperm.xlu0 %1941, %v1594
        %v1943 = vpop.permute.xlu0 %1942
        %1946 = vset.pattern.permute.xlu0 0
        %1947 = vperm.xlu0 %1946, %v1601
        %v1948 = vpop.permute.xlu0 %1947
        %1951 = vset.pattern.permute.xlu0 0
        %1952 = vperm.xlu0 %1951, %v1608
        %v1953 = vpop.permute.xlu0 %1952
        %1956 = vset.pattern.permute.xlu0 0
        %1957 = vperm.xlu0 %1956, %v1615
        %v1958 = vpop.permute.xlu0 %1957
        %1961 = vset.pattern.permute.xlu0 0
        %1962 = vperm.xlu0 %1961, %v1622
        %v1963 = vpop.permute.xlu0 %1962
        %1966 = vset.pattern.permute.xlu0 0
        %1967 = vperm.xlu0 %1966, %v1629
        %v1968 = vpop.permute.xlu0 %1967
        %1971 = vset.pattern.permute.xlu0 0
        %1972 = vperm.xlu0 %1971, %v1636
        %v1973 = vpop.permute.xlu0 %1972
        %1976 = vset.pattern.permute.xlu0 0
        %1977 = vperm.xlu0 %1976, %v1643
        %v1978 = vpop.permute.xlu0 %1977
        %1981 = vset.pattern.permute.xlu0 0
        %1982 = vperm.xlu0 %1981, %v1650
        %v1983 = vpop.permute.xlu0 %1982
        %1986 = vset.pattern.permute.xlu0 0
        %1987 = vperm.xlu0 %1986, %v1657
        %v1988 = vpop.permute.xlu0 %1987
        %1991 = vset.pattern.permute.xlu0 0
        %1992 = vperm.xlu0 %1991, %v1664
        %v1993 = vpop.permute.xlu0 %1992
        %1996 = vset.pattern.permute.xlu0 0
        %1997 = vperm.xlu0 %1996, %v1671
        %v1998 = vpop.permute.xlu0 %1997
        %2001 = vset.pattern.permute.xlu0 0
        %2002 = vperm.xlu0 %2001, %v1678
        %v2003 = vpop.permute.xlu0 %2002
        %2006 = vset.pattern.permute.xlu0 0
        %2007 = vperm.xlu0 %2006, %v1685
        %v2008 = vpop.permute.xlu0 %2007
        %2011 = vset.pattern.permute.xlu0 0
        %2012 = vperm.xlu0 %2011, %v1692
        %v2013 = vpop.permute.xlu0 %2012
        %2016 = vset.pattern.permute.xlu0 0
        %2017 = vperm.xlu0 %2016, %v1699
        %v2018 = vpop.permute.xlu0 %2017
        %v2020 = vmul.f32 %v1703, %v356
        %v2021 = vmul.f32 %v1708, %v357
        %v2022 = vmul.f32 %v1713, %v358
        %v2023 = vmul.f32 %v1718, %v359
        %v2024 = vmul.f32 %v1723, %v360
        %v2025 = vmul.f32 %v1728, %v361
        %v2026 = vmul.f32 %v1733, %v362
        %v2027 = vmul.f32 %v1738, %v363
        %v2028 = vmul.f32 %v1743, %v364
        %v2029 = vmul.f32 %v1748, %v365
        %v2030 = vmul.f32 %v1753, %v366
        %v2031 = vmul.f32 %v1758, %v367
        %v2032 = vmul.f32 %v1763, %v368
        %v2033 = vmul.f32 %v1768, %v369
        %v2034 = vmul.f32 %v1773, %v370
        %v2035 = vmul.f32 %v1778, %v371
        %v2036 = vmul.f32 %v1783, %v372
        %v2037 = vmul.f32 %v1788, %v373
        %v2038 = vmul.f32 %v1793, %v374
        %v2039 = vmul.f32 %v1798, %v375
        %v2040 = vmul.f32 %v1803, %v376
        %v2041 = vmul.f32 %v1808, %v377
        %v2042 = vmul.f32 %v1813, %v378
        %v2043 = vmul.f32 %v1818, %v379
        %v2044 = vmul.f32 %v1823, %v380
        %v2045 = vmul.f32 %v1828, %v381
        %v2046 = vmul.f32 %v1833, %v382
        %v2047 = vmul.f32 %v1838, %v383
        %v2048 = vmul.f32 %v1843, %v384
        %v2049 = vmul.f32 %v1848, %v385
        %v2050 = vmul.f32 %v1853, %v386
        %v2051 = vmul.f32 %v1858, %v387
        %v2052 = vmul.f32 %v1863, %v388
        %v2053 = vmul.f32 %v1868, %v389
        %v2054 = vmul.f32 %v1873, %v390
        %v2055 = vmul.f32 %v1878, %v391
        %v2056 = vmul.f32 %v1883, %v392
        %v2057 = vmul.f32 %v1888, %v393
        %v2058 = vmul.f32 %v1893, %v394
        %v2059 = vmul.f32 %v1898, %v395
        %v2060 = vmul.f32 %v1903, %v396
        %v2061 = vmul.f32 %v1908, %v397
        %v2062 = vmul.f32 %v1913, %v398
        %v2063 = vmul.f32 %v1918, %v399
        %v2064 = vmul.f32 %v1923, %v400
        %v2065 = vmul.f32 %v1928, %v401
        %v2066 = vmul.f32 %v1933, %v402
        %v2067 = vmul.f32 %v1938, %v403
        %v2068 = vmul.f32 %v1943, %v404
        %v2069 = vmul.f32 %v1948, %v405
        %v2070 = vmul.f32 %v1953, %v406
        %v2071 = vmul.f32 %v1958, %v407
        %v2072 = vmul.f32 %v1963, %v408
        %v2073 = vmul.f32 %v1968, %v409
        %v2074 = vmul.f32 %v1973, %v410
        %v2075 = vmul.f32 %v1978, %v411
        %v2076 = vmul.f32 %v1983, %v412
        %v2077 = vmul.f32 %v1988, %v413
        %v2078 = vmul.f32 %v1993, %v414
        %v2079 = vmul.f32 %v1998, %v415
        %v2080 = vmul.f32 %v2003, %v416
        %v2081 = vmul.f32 %v2008, %v417
        %v2082 = vmul.f32 %v2013, %v418
        %v2083 = vmul.f32 %v2018, %v419
        %v2084 = vadd.f32 %v292, %v2020
        %v2085 = vadd.f32 %v293, %v2021
        %v2086 = vadd.f32 %v294, %v2022
        %v2087 = vadd.f32 %v295, %v2023
        %v2088 = vadd.f32 %v296, %v2024
        %v2089 = vadd.f32 %v297, %v2025
        %v2090 = vadd.f32 %v298, %v2026
        %v2091 = vadd.f32 %v299, %v2027
        %v2092 = vadd.f32 %v300, %v2028
        %v2093 = vadd.f32 %v301, %v2029
        %v2094 = vadd.f32 %v302, %v2030
        %v2095 = vadd.f32 %v303, %v2031
        %v2096 = vadd.f32 %v304, %v2032
        %v2097 = vadd.f32 %v305, %v2033
        %v2098 = vadd.f32 %v306, %v2034
        %v2099 = vadd.f32 %v307, %v2035
        %v2100 = vadd.f32 %v308, %v2036
        %v2101 = vadd.f32 %v309, %v2037
        %v2102 = vadd.f32 %v310, %v2038
        %v2103 = vadd.f32 %v311, %v2039
        %v2104 = vadd.f32 %v312, %v2040
        %v2105 = vadd.f32 %v313, %v2041
        %v2106 = vadd.f32 %v314, %v2042
        %v2107 = vadd.f32 %v315, %v2043
        %v2108 = vadd.f32 %v316, %v2044
        %v2109 = vadd.f32 %v317, %v2045
        %v2110 = vadd.f32 %v318, %v2046
        %v2111 = vadd.f32 %v319, %v2047
        %v2112 = vadd.f32 %v320, %v2048
        %v2113 = vadd.f32 %v321, %v2049
        %v2114 = vadd.f32 %v322, %v2050
        %v2115 = vadd.f32 %v323, %v2051
        %v2116 = vadd.f32 %v324, %v2052
        %v2117 = vadd.f32 %v325, %v2053
        %v2118 = vadd.f32 %v326, %v2054
        %v2119 = vadd.f32 %v327, %v2055
        %v2120 = vadd.f32 %v328, %v2056
        %v2121 = vadd.f32 %v329, %v2057
        %v2122 = vadd.f32 %v330, %v2058
        %v2123 = vadd.f32 %v331, %v2059
        %v2124 = vadd.f32 %v332, %v2060
        %v2125 = vadd.f32 %v333, %v2061
        %v2126 = vadd.f32 %v334, %v2062
        %v2127 = vadd.f32 %v335, %v2063
        %v2128 = vadd.f32 %v336, %v2064
        %v2129 = vadd.f32 %v337, %v2065
        %v2130 = vadd.f32 %v338, %v2066
        %v2131 = vadd.f32 %v339, %v2067
        %v2132 = vadd.f32 %v340, %v2068
        %v2133 = vadd.f32 %v341, %v2069
        %v2134 = vadd.f32 %v342, %v2070
        %v2135 = vadd.f32 %v343, %v2071
        %v2136 = vadd.f32 %v344, %v2072
        %v2137 = vadd.f32 %v345, %v2073
        %v2138 = vadd.f32 %v346, %v2074
        %v2139 = vadd.f32 %v347, %v2075
        %v2140 = vadd.f32 %v348, %v2076
        %v2141 = vadd.f32 %v349, %v2077
        %v2142 = vadd.f32 %v350, %v2078
        %v2143 = vadd.f32 %v351, %v2079
        %v2144 = vadd.f32 %v352, %v2080
        %v2145 = vadd.f32 %v353, %v2081
        %v2146 = vadd.f32 %v354, %v2082
        %v2147 = vadd.f32 %v355, %v2083
        %2148 = vst [vmem:[%s268] sm:$0xff] %v2084
        %2149 = vst [vmem:[%s268 + $0x8] sm:$0xff] %v2085
        %2150 = vst [vmem:[%s268 + $0x10] sm:$0xff] %v2086
        %2151 = vst [vmem:[%s268 + $0x18] sm:$0xff] %v2087
        %2152 = vst [vmem:[%s268 + $0x20] sm:$0xff] %v2088
        %2153 = vst [vmem:[%s268 + $0x28] sm:$0xff] %v2089
        %2154 = vst [vmem:[%s268 + $0x30] sm:$0xff] %v2090
        %2155 = vst [vmem:[%s268 + $0x38] sm:$0xff] %v2091
        %2156 = vst [vmem:[%s268 + $0x40] sm:$0xff] %v2092
        %2157 = vst [vmem:[%s268 + $0x48] sm:$0xff] %v2093
        %2158 = vst [vmem:[%s268 + $0x50] sm:$0xff] %v2094
        %2159 = vst [vmem:[%s268 + $0x58] sm:$0xff] %v2095
        %2160 = vst [vmem:[%s268 + $0x60] sm:$0xff] %v2096
        %2161 = vst [vmem:[%s268 + $0x68] sm:$0xff] %v2097
        %2162 = vst [vmem:[%s268 + $0x70] sm:$0xff] %v2098
        %2163 = vst [vmem:[%s268 + $0x78] sm:$0xff] %v2099
        %2164 = vst [vmem:[%s268 + $0x80] sm:$0xff] %v2100
        %2165 = vst [vmem:[%s268 + $0x88] sm:$0xff] %v2101
        %2166 = vst [vmem:[%s268 + $0x90] sm:$0xff] %v2102
        %2167 = vst [vmem:[%s268 + $0x98] sm:$0xff] %v2103
        %2168 = vst [vmem:[%s268 + $0xa0] sm:$0xff] %v2104
        %2169 = vst [vmem:[%s268 + $0xa8] sm:$0xff] %v2105
        %2170 = vst [vmem:[%s268 + $0xb0] sm:$0xff] %v2106
        %2171 = vst [vmem:[%s268 + $0xb8] sm:$0xff] %v2107
        %2172 = vst [vmem:[%s268 + $0xc0] sm:$0xff] %v2108
        %2173 = vst [vmem:[%s268 + $0xc8] sm:$0xff] %v2109
        %2174 = vst [vmem:[%s268 + $0xd0] sm:$0xff] %v2110
        %2175 = vst [vmem:[%s268 + $0xd8] sm:$0xff] %v2111
        %2176 = vst [vmem:[%s268 + $0xe0] sm:$0xff] %v2112
        %2177 = vst [vmem:[%s268 + $0xe8] sm:$0xff] %v2113
        %2178 = vst [vmem:[%s268 + $0xf0] sm:$0xff] %v2114
        %2179 = vst [vmem:[%s268 + $0xf8] sm:$0xff] %v2115
        %2180 = vst [vmem:[%s268 + $0x100] sm:$0xff] %v2116
        %2181 = vst [vmem:[%s268 + $0x108] sm:$0xff] %v2117
        %2182 = vst [vmem:[%s268 + $0x110] sm:$0xff] %v2118
        %2183 = vst [vmem:[%s268 + $0x118] sm:$0xff] %v2119
        %2184 = vst [vmem:[%s268 + $0x120] sm:$0xff] %v2120
        %2185 = vst [vmem:[%s268 + $0x128] sm:$0xff] %v2121
        %2186 = vst [vmem:[%s268 + $0x130] sm:$0xff] %v2122
        %2187 = vst [vmem:[%s268 + $0x138] sm:$0xff] %v2123
        %2188 = vst [vmem:[%s268 + $0x140] sm:$0xff] %v2124
        %2189 = vst [vmem:[%s268 + $0x148] sm:$0xff] %v2125
        %2190 = vst [vmem:[%s268 + $0x150] sm:$0xff] %v2126
        %2191 = vst [vmem:[%s268 + $0x158] sm:$0xff] %v2127
        %2192 = vst [vmem:[%s268 + $0x160] sm:$0xff] %v2128
        %2193 = vst [vmem:[%s268 + $0x168] sm:$0xff] %v2129
        %2194 = vst [vmem:[%s268 + $0x170] sm:$0xff] %v2130
        %2195 = vst [vmem:[%s268 + $0x178] sm:$0xff] %v2131
        %2196 = vst [vmem:[%s268 + $0x180] sm:$0xff] %v2132
        %2197 = vst [vmem:[%s268 + $0x188] sm:$0xff] %v2133
        %2198 = vst [vmem:[%s268 + $0x190] sm:$0xff] %v2134
        %2199 = vst [vmem:[%s268 + $0x198] sm:$0xff] %v2135
        %2200 = vst [vmem:[%s268 + $0x1a0] sm:$0xff] %v2136
        %2201 = vst [vmem:[%s268 + $0x1a8] sm:$0xff] %v2137
        %2202 = vst [vmem:[%s268 + $0x1b0] sm:$0xff] %v2138
        %2203 = vst [vmem:[%s268 + $0x1b8] sm:$0xff] %v2139
        %2204 = vst [vmem:[%s268 + $0x1c0] sm:$0xff] %v2140
        %2205 = vst [vmem:[%s268 + $0x1c8] sm:$0xff] %v2141
        %2206 = vst [vmem:[%s268 + $0x1d0] sm:$0xff] %v2142
        %2207 = vst [vmem:[%s268 + $0x1d8] sm:$0xff] %v2143
        %2208 = vst [vmem:[%s268 + $0x1e0] sm:$0xff] %v2144
        %2209 = vst [vmem:[%s268 + $0x1e8] sm:$0xff] %v2145
        %2210 = vst [vmem:[%s268 + $0x1f0] sm:$0xff] %v2146
        %2211 = vst [vmem:[%s268 + $0x1f8] sm:$0xff] %v2147
        %s2212 = sand.u32 %s135, 1
        %s2213 = scalar_lea.sflag [#allocation6], %s2212
        %s2214 = sand.u32 %s135, 1
        %s2215 = smul.addr %s2214, 512
        %s2216 = scalar_lea.vmem [#allocation7], %s2215
        // Predicated region
        $region37: #{tpu_custom_call.1} parent=31 // pred_check
          %p2217 = pneg %p145
        $region38: #{tpu_custom_call.1} parent=31 // pred_check_branch
          %2219 = sbr.rel (%p2217) target = $region40
        $region39: #{tpu_custom_call.1} parent=31 // pred_region
          %s2220 = smul.u32 64, %s32
          %s2222 = ssub.s32 8192, 8192
          %2223 = vsyncadd %s2213, %s2222
          %s2224 = smul.addr %s31, 64
          %s2225 = sadd.s32 %s2220, %s2224
          %s2226 = smul.addr %s2225, 128
          %s2227 = scalar_lea.hbm %s4, %s2226
          %s2228 = sshll.u32 %s2216, 4
          %s2229 = int_to_ptr.vmem [resolvable:$true] %s2228
          %2234 = dma.vmem_to_hbm [thread:$0]  %s2229, 8192, %s2227, %s2213, 128, 128, 8
        $region40: #{tpu_custom_call.1} parent=31 // pred_fallthru
          _
      $region32: #{tpu_custom_call.1} parent=5 // pred_fallthru
        _
      %p2235 = scmp.le.s32.totalorder 2, %s22
      // Predicated region
      $region41: #{tpu_custom_call.1} parent=5 // pred_check
        %p2236 = pneg %p2235
      $region42: #{tpu_custom_call.1} parent=5 // pred_check_branch
        %2238 = sbr.rel (%p2236) target = $region44
      $region43: #{tpu_custom_call.1} parent=5 // pred_region
        %s2239 = ssub.s32 %s22, 2
        // Predicated region
        $region45: #{tpu_custom_call.1} parent=43 // pred_check
          %p2240 = pneg %p151
        $region46: #{tpu_custom_call.1} parent=43 // pred_check_branch
          %2242 = sbr.rel (%p2240) target = $region48
        $region47: #{tpu_custom_call.1} parent=43 // pred_region
          %s2243 = sand.u32 %s136, 1
          %s2244 = scalar_lea.sflag [#allocation6], %s2243
          %s2245 = sand.u32 %s136, 1
          %s2246 = smul.addr %s2245, 512
          %s2247 = scalar_lea.vmem [#allocation7], %s2246
          %2248 = dma.done %s2244, 8192
        $region48: #{tpu_custom_call.1} parent=43 // pred_fallthru
          _
      $region44: #{tpu_custom_call.1} parent=5 // pred_fallthru
        _
    $region6: #{tpu_custom_call.1} parent=1 // loop_footer
      %s26 = sadd.s32 1, %s22
    $region7: #{tpu_custom_call.1} parent=1 // loop_footer_branch
      %21 = sbr.rel target = $region3
    $region8: #{tpu_custom_call.1} parent=1 // loop_exit
      _
    %2249 = vsyncpa [#allocation5], 1
    %s2250 = scalar_lea.sflag [#allocation5], 1
    %2251 = vsyncpa %s2250, 1
    %2252 = vsyncpa [#allocation6], 1
    %s2253 = scalar_lea.sflag [#allocation6], 1
    %2254 = vsyncpa %s2253, 1

</llo_original>
